<compile_context>
chip_gen: v6e
topology: v6e:2x2x1
jax: 0.10.0
libtpu: 0.0.40
codegen_flags: <defaults>
</compile_context>

<pallas_src>
import jax
import jax.numpy as jnp
import numpy as np
from jax.experimental import pallas as pl
from jax.experimental.pallas import tpu as pltpu


def _round_up(x, m):
    return ((x + m - 1) // m) * m


def _lstm_recurrence_kernel(gx_ref, whh_ref, hs_ref, h_scr, c_scr):
    """Recurrent LSTM core for one (batch_tile, time_chunk) block.

    gx_ref:  (T, 4, Bt, H) f32  precomputed input gates  x_t @ W_ih^T + b
    whh_ref: (4, H, H)     bf16 per-gate recurrent weights (W_hh_k^T)
    hs_ref:  (T, Bt, H)    f32  hidden states h_t for this block
    h_scr, c_scr: (Bt, H)  f32  recurrent state, persists across the time axis
    """
    # hidden_state=None in the PyTorch forward -> zero-initialized (h0, c0).
    # Reset keyed on the (innermost, sequential) time grid axis only.
    @pl.when(pl.program_id(1) == 0)
    def _():
        h_scr[...] = jnp.zeros_like(h_scr)
        c_scr[...] = jnp.zeros_like(c_scr)

    # Loop-invariant per-gate weight slabs (loaded once per invocation).
    w_i = whh_ref[0]
    w_f = whh_ref[1]
    w_g = whh_ref[2]
    w_o = whh_ref[3]

    h = h_scr[...]
    c = c_scr[...]
    t_steps = hs_ref.shape[0]
    for t in range(t_steps):                 # static, fully unrolled time chunk
        gx = gx_ref[t]                       # (4, Bt, H) f32
        h_b = h.astype(w_i.dtype)            # bf16 into the MXU; state stays f32
        i_g = jax.nn.sigmoid(
            gx[0] + jnp.dot(h_b, w_i, preferred_element_type=jnp.float32))
        f_g = jax.nn.sigmoid(
            gx[1] + jnp.dot(h_b, w_f, preferred_element_type=jnp.float32))
        g_g = jnp.tanh(
            gx[2] + jnp.dot(h_b, w_g, preferred_element_type=jnp.float32))
        o_g = jax.nn.sigmoid(
            gx[3] + jnp.dot(h_b, w_o, preferred_element_type=jnp.float32))
        c = f_g * c + i_g * g_g
        h = o_g * jnp.tanh(c)
        hs_ref[t] = h                        # lane-dense (Bt, H) store
    h_scr[...] = h
    c_scr[...] = c


def lstm_forward(x, params, output_shape, hidden_dim, *, time_chunk=8):
    """Pallas implementation of _LSTM.forward(X, hidden_state=None)."""
    B, S, F = x.shape
    H = hidden_dim

    # ---- padding / tiling --------------------------------------------------
    Bp = _round_up(max(B, 8), 8)             # sublane-aligned batch
    if Bp > 128:
        Bt = 128
        Bp = _round_up(Bp, 128)
    else:
        Bt = Bp
    T = max(1, min(time_chunk, S))
    S_pad = _round_up(S, T)

    # ---- hoisted input projection: one big lane-dense bf16 matmul (XLA) ----
    w_ih_g = params["w_ih"].reshape(4, H, F).transpose(0, 2, 1)      # (4, F, H)
    bias = (params["b_ih"] + params["b_hh"]).reshape(1, 4, 1, H)
    gx = jnp.einsum(
        "bsf,kfh->skbh",
        x.astype(jnp.bfloat16), w_ih_g.astype(jnp.bfloat16),
        preferred_element_type=jnp.float32) + bias                   # (S,4,B,H)
    gx = jnp.pad(gx, ((0, S_pad - S), (0, 0), (0, Bp - B), (0, 0)))  # causal pad

    # Per-gate recurrent weight slabs, bf16 for the MXU.
    whh_g = (params["w_hh"].reshape(4, H, H)
             .transpose(0, 2, 1).astype(jnp.bfloat16))               # (4, H, H)

    grid = (Bp // Bt, S_pad // T)

    hs = pl.pallas_call(
        _lstm_recurrence_kernel,
        out_shape=jax.ShapeDtypeStruct((S_pad, Bp, H), jnp.float32),
        grid_spec=pltpu.PrefetchScalarGridSpec(
            num_scalar_prefetch=0,
            grid=grid,
            in_specs=[
                pl.BlockSpec((T, 4, Bt, H), lambda b, s: (s, 0, b, 0)),
                pl.BlockSpec((4, H, H), lambda b, s: (0, 0, 0)),
            ],
            out_specs=pl.BlockSpec((T, Bt, H), lambda b, s: (s, b, 0)),
            scratch_shapes=[
                pltpu.VMEM((Bt, H), jnp.float32),   # h
                pltpu.VMEM((Bt, H), jnp.float32),   # c
            ],
        ),
        compiler_params=pltpu.CompilerParams(
            # batch tiles are independent (megacore on v7x); time is serial.
            dimension_semantics=("parallel", "arbitrary"),
            vmem_limit_bytes=32 * 1024 * 1024,
        ),
    )(gx, whh_g)

    hs = hs[:S, :B]                                  # drop time/batch padding

    # ---- hoisted output projection: lane-dense, outside the recurrence -----
    w_out_t = params["w_out"].T                      # (H, O)
    if len(output_shape) == 1:
        # output[:, -1, :] then Linear  ==  Linear applied to the last h_t.
        return hs[-1] @ w_out_t + params["b_out"]                    # (B, O)
    out = jnp.einsum("sbh,ho->bso", hs, w_out_t) + params["b_out"]   # (B, S, O)
    return out


def lstm_reference(x, params, output_shape, hidden_dim):
    """Pure-JAX reference mirroring torch.nn.LSTM + Linear semantics."""
    B, S, F = x.shape

    def step(carry, x_t):
        h, c = carry
        gates = (x_t @ params["w_ih"].T + params["b_ih"]
                 + h @ params["w_hh"].T + params["b_hh"])
        i, f, g, o = jnp.split(gates, 4, axis=-1)
        i, f, o = jax.nn.sigmoid(i), jax.nn.sigmoid(f), jax.nn.sigmoid(o)
        g = jnp.tanh(g)
        c = f * c + i * g
        h = o * jnp.tanh(c)
        return (h, c), h

    h0 = jnp.zeros((B, hidden_dim), jnp.float32)
    c0 = jnp.zeros((B, hidden_dim), jnp.float32)
    _, hs = jax.lax.scan(step, (h0, c0), jnp.transpose(x, (1, 0, 2)))
    hs = jnp.transpose(hs, (1, 0, 2))                # (B, S, H)
    out = hs @ params["w_out"].T + params["b_out"]
    if len(output_shape) == 1:
        return out[:, -1, :]
    return out


def init_params(key, n_features, hidden_dim, n_out):
    """Deterministic synthetic parameters, PyTorch-style U(-1/sqrt(H), 1/sqrt(H))."""
    ks = jax.random.split(key, 6)
    bound = 1.0 / np.sqrt(hidden_dim)
    u = lambda k, shape: jax.random.uniform(k, shape, jnp.float32, -bound, bound)
    return {
        "w_ih": u(ks[0], (4 * hidden_dim, n_features)),
        "w_hh": u(ks[1], (4 * hidden_dim, hidden_dim)),
        "b_ih": u(ks[2], (4 * hidden_dim,)),
        "b_hh": u(ks[3], (4 * hidden_dim,)),
        "w_out": u(ks[4], (n_out, hidden_dim)),
        "b_out": u(ks[5], (n_out,)),
    }


if __name__ == "__main__":
    # Small shapes consistent with the module: X is (n_samples, seq_len, n_features).
    # seq_len=12 with time_chunk=8 exercises time padding + state carry across
    # grid steps; batch=2 exercises sublane padding to 8.
    batch, seq_len, n_features, hidden_dim = 2, 12, 4, 32
    input_shape = (seq_len, n_features)          # input_shape[1] -> LSTM input size
    output_shape_seq = (seq_len, 3)              # per-timestep output branch
    output_shape_last = (3,)                     # last-timestep output branch

    key = jax.random.PRNGKey(0)
    kx, kp = jax.random.split(key)
    x = jax.random.normal(kx, (batch, seq_len, n_features), jnp.float32)
    params = init_params(kp, n_features, hidden_dim, output_shape_seq[-1])

    # Sequence-output branch (len(output_shape) != 1)
    out_seq = jax.block_until_ready(
        lstm_forward(x, params, output_shape_seq, hidden_dim, time_chunk=8))
    ref_seq = lstm_reference(x, params, output_shape_seq, hidden_dim)
    np.testing.assert_allclose(np.asarray(out_seq), np.asarray(ref_seq),
                               rtol=5e-2, atol=5e-2)

    # Last-timestep branch (len(output_shape) == 1)
    out_last = jax.block_until_ready(
        lstm_forward(x, params, output_shape_last, hidden_dim, time_chunk=8))
    ref_last = lstm_reference(x, params, output_shape_last, hidden_dim)
    np.testing.assert_allclose(np.asarray(out_last), np.asarray(ref_last),
                               rtol=5e-2, atol=5e-2)

    assert out_seq.shape == (batch, seq_len, output_shape_seq[-1])
    assert out_last.shape == (batch, output_shape_last[-1])
    print("KERNEL_OK")
</pallas_src>

<mosaic_0001>
module attributes {stable_mosaic.version = 11 : i64} {
  func.func @_lstm_recurrence_kernel(%arg0: i32, %arg1: i32, %arg2: memref<8x4x8x32xf32, #tpu.memory_space<vmem>>, %arg3: memref<4x32x32xbf16, #tpu.memory_space<vmem>>, %arg4: memref<8x8x32xf32, #tpu.memory_space<vmem>>, %arg5: memref<8x32xf32, #tpu.memory_space<vmem>>, %arg6: memref<8x32xf32, #tpu.memory_space<vmem>>) attributes {dimension_semantics = [#tpu.dimension_semantics<parallel>, #tpu.dimension_semantics<arbitrary>], iteration_bounds = array<i64: 1, 2>, scalar_prefetch = 0 : i64, scratch_operands = 2 : i64, tpu.core_type = #tpu.core_type<tc>, window_params = [{transform_indices = @transform_0, window_bounds = array<i64: 8, 4, 8, 32>}, {pipeline_mode = #tpu.pipeline_mode<synchronous>, transform_indices = @transform_1, window_bounds = array<i64: 4, 32, 32>}, {transform_indices = @transform_2, window_bounds = array<i64: 8, 8, 32>}]} {
    %c0_i32 = arith.constant 0 : i32
    %0 = arith.cmpi eq, %arg1, %c0_i32 : i32
    %1 = arith.extui %0 : i1 to i32
    %c0_i32_0 = arith.constant 0 : i32
    %2 = arith.cmpi ne, %1, %c0_i32_0 : i32
    scf.if %2 {
      %cst_124 = arith.constant 0.000000e+00 : f32
      %359 = vector.broadcast %cst_124 : f32 to vector<8x32xf32>
      %c0_125 = arith.constant 0 : index
      %c0_126 = arith.constant 0 : index
      %360 = vector.load %arg5[%c0_125, %c0_126] : memref<8x32xf32, #tpu.memory_space<vmem>>, vector<8x32xf32>
      tpu.vector_store %arg5[%c0_125, %c0_126], %359 {strides = array<i32>} : memref<8x32xf32, #tpu.memory_space<vmem>>, vector<8x32xf32>,
      %cst_127 = arith.constant 0.000000e+00 : f32
      %361 = vector.broadcast %cst_127 : f32 to vector<8x32xf32>
      %c0_128 = arith.constant 0 : index
      %c0_129 = arith.constant 0 : index
      %362 = vector.load %arg6[%c0_128, %c0_129] : memref<8x32xf32, #tpu.memory_space<vmem>>, vector<8x32xf32>
      tpu.vector_store %arg6[%c0_128, %c0_129], %361 {strides = array<i32>} : memref<8x32xf32, #tpu.memory_space<vmem>>, vector<8x32xf32>,
    } else {
    }
    %c0 = arith.constant 0 : index
    %c0_1 = arith.constant 0 : index
    %c0_2 = arith.constant 0 : index
    %3 = vector.load %arg3[%c0, %c0_1, %c0_2] : memref<4x32x32xbf16, #tpu.memory_space<vmem>>, vector<1x32x32xbf16>
    %4 = vector.shape_cast %3 : vector<1x32x32xbf16> to vector<32x32xbf16>
    %c1 = arith.constant 1 : index
    %c0_3 = arith.constant 0 : index
    %c0_4 = arith.constant 0 : index
    %5 = vector.load %arg3[%c1, %c0_3, %c0_4] : memref<4x32x32xbf16, #tpu.memory_space<vmem>>, vector<1x32x32xbf16>
    %6 = vector.shape_cast %5 : vector<1x32x32xbf16> to vector<32x32xbf16>
    %c2 = arith.constant 2 : index
    %c0_5 = arith.constant 0 : index
    %c0_6 = arith.constant 0 : index
    %7 = vector.load %arg3[%c2, %c0_5, %c0_6] : memref<4x32x32xbf16, #tpu.memory_space<vmem>>, vector<1x32x32xbf16>
    %8 = vector.shape_cast %7 : vector<1x32x32xbf16> to vector<32x32xbf16>
    %c3 = arith.constant 3 : index
    %c0_7 = arith.constant 0 : index
    %c0_8 = arith.constant 0 : index
    %9 = vector.load %arg3[%c3, %c0_7, %c0_8] : memref<4x32x32xbf16, #tpu.memory_space<vmem>>, vector<1x32x32xbf16>
    %10 = vector.shape_cast %9 : vector<1x32x32xbf16> to vector<32x32xbf16>
    %c0_9 = arith.constant 0 : index
    %c0_10 = arith.constant 0 : index
    %11 = vector.load %arg5[%c0_9, %c0_10] : memref<8x32xf32, #tpu.memory_space<vmem>>, vector<8x32xf32>
    %c0_11 = arith.constant 0 : index
    %c0_12 = arith.constant 0 : index
    %12 = vector.load %arg6[%c0_11, %c0_12] : memref<8x32xf32, #tpu.memory_space<vmem>>, vector<8x32xf32>
    %c0_13 = arith.constant 0 : index
    %c0_14 = arith.constant 0 : index
    %c0_15 = arith.constant 0 : index
    %c0_16 = arith.constant 0 : index
    %13 = vector.load %arg2[%c0_13, %c0_14, %c0_15, %c0_16] : memref<8x4x8x32xf32, #tpu.memory_space<vmem>>, vector<1x4x8x32xf32>
    %14 = vector.shape_cast %13 : vector<1x4x8x32xf32> to vector<4x8x32xf32>
    %15 = arith.truncf %11 : vector<8x32xf32> to vector<8x32xbf16>
    %16 = vector.extract_strided_slice %14 {offsets = [0, 0, 0], sizes = [1, 8, 32], strides = [1, 1, 1]} : vector<4x8x32xf32> to vector<1x8x32xf32>
    %17 = vector.shape_cast %16 : vector<1x8x32xf32> to vector<8x32xf32>
    %cst = arith.constant dense<0.000000e+00> : vector<8x32xf32>
    %18 = tpu.matmul %15, %4, %cst {dimension_numbers = #tpu.dot_dimension_numbers<[1], [0], [0], [1], [0, 0, 1, 1], [], []>} : vector<8x32xbf16>, vector<32x32xbf16>, vector<8x32xf32> -> vector<8x32xf32>
    %19 = arith.addf %17, %18 : vector<8x32xf32>
    %20 = arith.negf %19 : vector<8x32xf32>
    %21 = math.exp %20 : vector<8x32xf32>
    %cst_17 = arith.constant 1.000000e+00 : f32
    %22 = vector.broadcast %cst_17 : f32 to vector<8x32xf32>
    %23 = arith.addf %22, %21 : vector<8x32xf32>
    %24 = arith.divf %22, %23 : vector<8x32xf32>
    %25 = vector.extract_strided_slice %14 {offsets = [1, 0, 0], sizes = [1, 8, 32], strides = [1, 1, 1]} : vector<4x8x32xf32> to vector<1x8x32xf32>
    %26 = vector.shape_cast %25 : vector<1x8x32xf32> to vector<8x32xf32>
    %cst_18 = arith.constant dense<0.000000e+00> : vector<8x32xf32>
    %27 = tpu.matmul %15, %6, %cst_18 {dimension_numbers = #tpu.dot_dimension_numbers<[1], [0], [0], [1], [0, 0, 1, 1], [], []>} : vector<8x32xbf16>, vector<32x32xbf16>, vector<8x32xf32> -> vector<8x32xf32>
    %28 = arith.addf %26, %27 : vector<8x32xf32>
    %29 = arith.negf %28 : vector<8x32xf32>
    %30 = math.exp %29 : vector<8x32xf32>
    %cst_19 = arith.constant 1.000000e+00 : f32
    %31 = vector.broadcast %cst_19 : f32 to vector<8x32xf32>
    %32 = arith.addf %31, %30 : vector<8x32xf32>
    %33 = arith.divf %31, %32 : vector<8x32xf32>
    %34 = vector.extract_strided_slice %14 {offsets = [2, 0, 0], sizes = [1, 8, 32], strides = [1, 1, 1]} : vector<4x8x32xf32> to vector<1x8x32xf32>
    %35 = vector.shape_cast %34 : vector<1x8x32xf32> to vector<8x32xf32>
    %cst_20 = arith.constant dense<0.000000e+00> : vector<8x32xf32>
    %36 = tpu.matmul %15, %8, %cst_20 {dimension_numbers = #tpu.dot_dimension_numbers<[1], [0], [0], [1], [0, 0, 1, 1], [], []>} : vector<8x32xbf16>, vector<32x32xbf16>, vector<8x32xf32> -> vector<8x32xf32>
    %37 = arith.addf %35, %36 : vector<8x32xf32>
    %38 = math.tanh %37 : vector<8x32xf32>
    %39 = vector.extract_strided_slice %14 {offsets = [3, 0, 0], sizes = [1, 8, 32], strides = [1, 1, 1]} : vector<4x8x32xf32> to vector<1x8x32xf32>
    %40 = vector.shape_cast %39 : vector<1x8x32xf32> to vector<8x32xf32>
    %cst_21 = arith.constant dense<0.000000e+00> : vector<8x32xf32>
    %41 = tpu.matmul %15, %10, %cst_21 {dimension_numbers = #tpu.dot_dimension_numbers<[1], [0], [0], [1], [0, 0, 1, 1], [], []>} : vector<8x32xbf16>, vector<32x32xbf16>, vector<8x32xf32> -> vector<8x32xf32>
    %42 = arith.addf %40, %41 : vector<8x32xf32>
    %43 = arith.negf %42 : vector<8x32xf32>
    %44 = math.exp %43 : vector<8x32xf32>
    %cst_22 = arith.constant 1.000000e+00 : f32
    %45 = vector.broadcast %cst_22 : f32 to vector<8x32xf32>
    %46 = arith.addf %45, %44 : vector<8x32xf32>
    %47 = arith.divf %45, %46 : vector<8x32xf32>
    %48 = arith.mulf %33, %12 : vector<8x32xf32>
    %49 = arith.mulf %24, %38 : vector<8x32xf32>
    %50 = arith.addf %48, %49 : vector<8x32xf32>
    %51 = math.tanh %50 : vector<8x32xf32>
    %52 = arith.mulf %47, %51 : vector<8x32xf32>
    %c0_23 = arith.constant 0 : index
    %c0_24 = arith.constant 0 : index
    %c0_25 = arith.constant 0 : index
    %53 = vector.load %arg4[%c0_23, %c0_24, %c0_25] : memref<8x8x32xf32, #tpu.memory_space<vmem>>, vector<1x8x32xf32>
    %54 = vector.shape_cast %53 : vector<1x8x32xf32> to vector<8x32xf32>
    %55 = vector.shape_cast %52 : vector<8x32xf32> to vector<1x8x32xf32>
    tpu.vector_store %arg4[%c0_23, %c0_24, %c0_25], %55 {strides = array<i32>} : memref<8x8x32xf32, #tpu.memory_space<vmem>>, vector<1x8x32xf32>,
    %c1_26 = arith.constant 1 : index
    %c0_27 = arith.constant 0 : index
    %c0_28 = arith.constant 0 : index
    %c0_29 = arith.constant 0 : index
    %56 = vector.load %arg2[%c1_26, %c0_27, %c0_28, %c0_29] : memref<8x4x8x32xf32, #tpu.memory_space<vmem>>, vector<1x4x8x32xf32>
    %57 = vector.shape_cast %56 : vector<1x4x8x32xf32> to vector<4x8x32xf32>
    %58 = arith.truncf %52 : vector<8x32xf32> to vector<8x32xbf16>
    %59 = vector.extract_strided_slice %57 {offsets = [0, 0, 0], sizes = [1, 8, 32], strides = [1, 1, 1]} : vector<4x8x32xf32> to vector<1x8x32xf32>
    %60 = vector.shape_cast %59 : vector<1x8x32xf32> to vector<8x32xf32>
    %cst_30 = arith.constant dense<0.000000e+00> : vector<8x32xf32>
    %61 = tpu.matmul %58, %4, %cst_30 {dimension_numbers = #tpu.dot_dimension_numbers<[1], [0], [0], [1], [0, 0, 1, 1], [], []>} : vector<8x32xbf16>, vector<32x32xbf16>, vector<8x32xf32> -> vector<8x32xf32>
    %62 = arith.addf %60, %61 : vector<8x32xf32>
    %63 = arith.negf %62 : vector<8x32xf32>
    %64 = math.exp %63 : vector<8x32xf32>
    %cst_31 = arith.constant 1.000000e+00 : f32
    %65 = vector.broadcast %cst_31 : f32 to vector<8x32xf32>
    %66 = arith.addf %65, %64 : vector<8x32xf32>
    %67 = arith.divf %65, %66 : vector<8x32xf32>
    %68 = vector.extract_strided_slice %57 {offsets = [1, 0, 0], sizes = [1, 8, 32], strides = [1, 1, 1]} : vector<4x8x32xf32> to vector<1x8x32xf32>
    %69 = vector.shape_cast %68 : vector<1x8x32xf32> to vector<8x32xf32>
    %cst_32 = arith.constant dense<0.000000e+00> : vector<8x32xf32>
    %70 = tpu.matmul %58, %6, %cst_32 {dimension_numbers = #tpu.dot_dimension_numbers<[1], [0], [0], [1], [0, 0, 1, 1], [], []>} : vector<8x32xbf16>, vector<32x32xbf16>, vector<8x32xf32> -> vector<8x32xf32>
    %71 = arith.addf %69, %70 : vector<8x32xf32>
    %72 = arith.negf %71 : vector<8x32xf32>
    %73 = math.exp %72 : vector<8x32xf32>
    %cst_33 = arith.constant 1.000000e+00 : f32
    %74 = vector.broadcast %cst_33 : f32 to vector<8x32xf32>
    %75 = arith.addf %74, %73 : vector<8x32xf32>
    %76 = arith.divf %74, %75 : vector<8x32xf32>
    %77 = vector.extract_strided_slice %57 {offsets = [2, 0, 0], sizes = [1, 8, 32], strides = [1, 1, 1]} : vector<4x8x32xf32> to vector<1x8x32xf32>
    %78 = vector.shape_cast %77 : vector<1x8x32xf32> to vector<8x32xf32>
    %cst_34 = arith.constant dense<0.000000e+00> : vector<8x32xf32>
    %79 = tpu.matmul %58, %8, %cst_34 {dimension_numbers = #tpu.dot_dimension_numbers<[1], [0], [0], [1], [0, 0, 1, 1], [], []>} : vector<8x32xbf16>, vector<32x32xbf16>, vector<8x32xf32> -> vector<8x32xf32>
    %80 = arith.addf %78, %79 : vector<8x32xf32>
    %81 = math.tanh %80 : vector<8x32xf32>
    %82 = vector.extract_strided_slice %57 {offsets = [3, 0, 0], sizes = [1, 8, 32], strides = [1, 1, 1]} : vector<4x8x32xf32> to vector<1x8x32xf32>
    %83 = vector.shape_cast %82 : vector<1x8x32xf32> to vector<8x32xf32>
    %cst_35 = arith.constant dense<0.000000e+00> : vector<8x32xf32>
    %84 = tpu.matmul %58, %10, %cst_35 {dimension_numbers = #tpu.dot_dimension_numbers<[1], [0], [0], [1], [0, 0, 1, 1], [], []>} : vector<8x32xbf16>, vector<32x32xbf16>, vector<8x32xf32> -> vector<8x32xf32>
    %85 = arith.addf %83, %84 : vector<8x32xf32>
    %86 = arith.negf %85 : vector<8x32xf32>
    %87 = math.exp %86 : vector<8x32xf32>
    %cst_36 = arith.constant 1.000000e+00 : f32
    %88 = vector.broadcast %cst_36 : f32 to vector<8x32xf32>
    %89 = arith.addf %88, %87 : vector<8x32xf32>
    %90 = arith.divf %88, %89 : vector<8x32xf32>
    %91 = arith.mulf %76, %50 : vector<8x32xf32>
    %92 = arith.mulf %67, %81 : vector<8x32xf32>
    %93 = arith.addf %91, %92 : vector<8x32xf32>
    %94 = math.tanh %93 : vector<8x32xf32>
    %95 = arith.mulf %90, %94 : vector<8x32xf32>
    %c1_37 = arith.constant 1 : index
    %c0_38 = arith.constant 0 : index
    %c0_39 = arith.constant 0 : index
    %96 = vector.load %arg4[%c1_37, %c0_38, %c0_39] : memref<8x8x32xf32, #tpu.memory_space<vmem>>, vector<1x8x32xf32>
    %97 = vector.shape_cast %96 : vector<1x8x32xf32> to vector<8x32xf32>
    %98 = vector.shape_cast %95 : vector<8x32xf32> to vector<1x8x32xf32>
    tpu.vector_store %arg4[%c1_37, %c0_38, %c0_39], %98 {strides = array<i32>} : memref<8x8x32xf32, #tpu.memory_space<vmem>>, vector<1x8x32xf32>,
    %c2_40 = arith.constant 2 : index
    %c0_41 = arith.constant 0 : index
    %c0_42 = arith.constant 0 : index
    %c0_43 = arith.constant 0 : index
    %99 = vector.load %arg2[%c2_40, %c0_41, %c0_42, %c0_43] : memref<8x4x8x32xf32, #tpu.memory_space<vmem>>, vector<1x4x8x32xf32>
    %100 = vector.shape_cast %99 : vector<1x4x8x32xf32> to vector<4x8x32xf32>
    %101 = arith.truncf %95 : vector<8x32xf32> to vector<8x32xbf16>
    %102 = vector.extract_strided_slice %100 {offsets = [0, 0, 0], sizes = [1, 8, 32], strides = [1, 1, 1]} : vector<4x8x32xf32> to vector<1x8x32xf32>
    %103 = vector.shape_cast %102 : vector<1x8x32xf32> to vector<8x32xf32>
    %cst_44 = arith.constant dense<0.000000e+00> : vector<8x32xf32>
    %104 = tpu.matmul %101, %4, %cst_44 {dimension_numbers = #tpu.dot_dimension_numbers<[1], [0], [0], [1], [0, 0, 1, 1], [], []>} : vector<8x32xbf16>, vector<32x32xbf16>, vector<8x32xf32> -> vector<8x32xf32>
    %105 = arith.addf %103, %104 : vector<8x32xf32>
    %106 = arith.negf %105 : vector<8x32xf32>
    %107 = math.exp %106 : vector<8x32xf32>
    %cst_45 = arith.constant 1.000000e+00 : f32
    %108 = vector.broadcast %cst_45 : f32 to vector<8x32xf32>
    %109 = arith.addf %108, %107 : vector<8x32xf32>
    %110 = arith.divf %108, %109 : vector<8x32xf32>
    %111 = vector.extract_strided_slice %100 {offsets = [1, 0, 0], sizes = [1, 8, 32], strides = [1, 1, 1]} : vector<4x8x32xf32> to vector<1x8x32xf32>
    %112 = vector.shape_cast %111 : vector<1x8x32xf32> to vector<8x32xf32>
    %cst_46 = arith.constant dense<0.000000e+00> : vector<8x32xf32>
    %113 = tpu.matmul %101, %6, %cst_46 {dimension_numbers = #tpu.dot_dimension_numbers<[1], [0], [0], [1], [0, 0, 1, 1], [], []>} : vector<8x32xbf16>, vector<32x32xbf16>, vector<8x32xf32> -> vector<8x32xf32>
    %114 = arith.addf %112, %113 : vector<8x32xf32>
    %115 = arith.negf %114 : vector<8x32xf32>
    %116 = math.exp %115 : vector<8x32xf32>
    %cst_47 = arith.constant 1.000000e+00 : f32
    %117 = vector.broadcast %cst_47 : f32 to vector<8x32xf32>
    %118 = arith.addf %117, %116 : vector<8x32xf32>
    %119 = arith.divf %117, %118 : vector<8x32xf32>
    %120 = vector.extract_strided_slice %100 {offsets = [2, 0, 0], sizes = [1, 8, 32], strides = [1, 1, 1]} : vector<4x8x32xf32> to vector<1x8x32xf32>
    %121 = vector.shape_cast %120 : vector<1x8x32xf32> to vector<8x32xf32>
    %cst_48 = arith.constant dense<0.000000e+00> : vector<8x32xf32>
    %122 = tpu.matmul %101, %8, %cst_48 {dimension_numbers = #tpu.dot_dimension_numbers<[1], [0], [0], [1], [0, 0, 1, 1], [], []>} : vector<8x32xbf16>, vector<32x32xbf16>, vector<8x32xf32> -> vector<8x32xf32>
    %123 = arith.addf %121, %122 : vector<8x32xf32>
    %124 = math.tanh %123 : vector<8x32xf32>
    %125 = vector.extract_strided_slice %100 {offsets = [3, 0, 0], sizes = [1, 8, 32], strides = [1, 1, 1]} : vector<4x8x32xf32> to vector<1x8x32xf32>
    %126 = vector.shape_cast %125 : vector<1x8x32xf32> to vector<8x32xf32>
    %cst_49 = arith.constant dense<0.000000e+00> : vector<8x32xf32>
    %127 = tpu.matmul %101, %10, %cst_49 {dimension_numbers = #tpu.dot_dimension_numbers<[1], [0], [0], [1], [0, 0, 1, 1], [], []>} : vector<8x32xbf16>, vector<32x32xbf16>, vector<8x32xf32> -> vector<8x32xf32>
    %128 = arith.addf %126, %127 : vector<8x32xf32>
    %129 = arith.negf %128 : vector<8x32xf32>
    %130 = math.exp %129 : vector<8x32xf32>
    %cst_50 = arith.constant 1.000000e+00 : f32
    %131 = vector.broadcast %cst_50 : f32 to vector<8x32xf32>
    %132 = arith.addf %131, %130 : vector<8x32xf32>
    %133 = arith.divf %131, %132 : vector<8x32xf32>
    %134 = arith.mulf %119, %93 : vector<8x32xf32>
    %135 = arith.mulf %110, %124 : vector<8x32xf32>
    %136 = arith.addf %134, %135 : vector<8x32xf32>
    %137 = math.tanh %136 : vector<8x32xf32>
    %138 = arith.mulf %133, %137 : vector<8x32xf32>
    %c2_51 = arith.constant 2 : index
    %c0_52 = arith.constant 0 : index
    %c0_53 = arith.constant 0 : index
    %139 = vector.load %arg4[%c2_51, %c0_52, %c0_53] : memref<8x8x32xf32, #tpu.memory_space<vmem>>, vector<1x8x32xf32>
    %140 = vector.shape_cast %139 : vector<1x8x32xf32> to vector<8x32xf32>
    %141 = vector.shape_cast %138 : vector<8x32xf32> to vector<1x8x32xf32>
    tpu.vector_store %arg4[%c2_51, %c0_52, %c0_53], %141 {strides = array<i32>} : memref<8x8x32xf32, #tpu.memory_space<vmem>>, vector<1x8x32xf32>,
    %c3_54 = arith.constant 3 : index
    %c0_55 = arith.constant 0 : index
    %c0_56 = arith.constant 0 : index
    %c0_57 = arith.constant 0 : index
    %142 = vector.load %arg2[%c3_54, %c0_55, %c0_56, %c0_57] : memref<8x4x8x32xf32, #tpu.memory_space<vmem>>, vector<1x4x8x32xf32>
    %143 = vector.shape_cast %142 : vector<1x4x8x32xf32> to vector<4x8x32xf32>
    %144 = arith.truncf %138 : vector<8x32xf32> to vector<8x32xbf16>
    %145 = vector.extract_strided_slice %143 {offsets = [0, 0, 0], sizes = [1, 8, 32], strides = [1, 1, 1]} : vector<4x8x32xf32> to vector<1x8x32xf32>
    %146 = vector.shape_cast %145 : vector<1x8x32xf32> to vector<8x32xf32>
    %cst_58 = arith.constant dense<0.000000e+00> : vector<8x32xf32>
    %147 = tpu.matmul %144, %4, %cst_58 {dimension_numbers = #tpu.dot_dimension_numbers<[1], [0], [0], [1], [0, 0, 1, 1], [], []>} : vector<8x32xbf16>, vector<32x32xbf16>, vector<8x32xf32> -> vector<8x32xf32>
    %148 = arith.addf %146, %147 : vector<8x32xf32>
    %149 = arith.negf %148 : vector<8x32xf32>
    %150 = math.exp %149 : vector<8x32xf32>
    %cst_59 = arith.constant 1.000000e+00 : f32
    %151 = vector.broadcast %cst_59 : f32 to vector<8x32xf32>
    %152 = arith.addf %151, %150 : vector<8x32xf32>
    %153 = arith.divf %151, %152 : vector<8x32xf32>
    %154 = vector.extract_strided_slice %143 {offsets = [1, 0, 0], sizes = [1, 8, 32], strides = [1, 1, 1]} : vector<4x8x32xf32> to vector<1x8x32xf32>
    %155 = vector.shape_cast %154 : vector<1x8x32xf32> to vector<8x32xf32>
    %cst_60 = arith.constant dense<0.000000e+00> : vector<8x32xf32>
    %156 = tpu.matmul %144, %6, %cst_60 {dimension_numbers = #tpu.dot_dimension_numbers<[1], [0], [0], [1], [0, 0, 1, 1], [], []>} : vector<8x32xbf16>, vector<32x32xbf16>, vector<8x32xf32> -> vector<8x32xf32>
    %157 = arith.addf %155, %156 : vector<8x32xf32>
    %158 = arith.negf %157 : vector<8x32xf32>
    %159 = math.exp %158 : vector<8x32xf32>
    %cst_61 = arith.constant 1.000000e+00 : f32
    %160 = vector.broadcast %cst_61 : f32 to vector<8x32xf32>
    %161 = arith.addf %160, %159 : vector<8x32xf32>
    %162 = arith.divf %160, %161 : vector<8x32xf32>
    %163 = vector.extract_strided_slice %143 {offsets = [2, 0, 0], sizes = [1, 8, 32], strides = [1, 1, 1]} : vector<4x8x32xf32> to vector<1x8x32xf32>
    %164 = vector.shape_cast %163 : vector<1x8x32xf32> to vector<8x32xf32>
    %cst_62 = arith.constant dense<0.000000e+00> : vector<8x32xf32>
    %165 = tpu.matmul %144, %8, %cst_62 {dimension_numbers = #tpu.dot_dimension_numbers<[1], [0], [0], [1], [0, 0, 1, 1], [], []>} : vector<8x32xbf16>, vector<32x32xbf16>, vector<8x32xf32> -> vector<8x32xf32>
    %166 = arith.addf %164, %165 : vector<8x32xf32>
    %167 = math.tanh %166 : vector<8x32xf32>
    %168 = vector.extract_strided_slice %143 {offsets = [3, 0, 0], sizes = [1, 8, 32], strides = [1, 1, 1]} : vector<4x8x32xf32> to vector<1x8x32xf32>
    %169 = vector.shape_cast %168 : vector<1x8x32xf32> to vector<8x32xf32>
    %cst_63 = arith.constant dense<0.000000e+00> : vector<8x32xf32>
    %170 = tpu.matmul %144, %10, %cst_63 {dimension_numbers = #tpu.dot_dimension_numbers<[1], [0], [0], [1], [0, 0, 1, 1], [], []>} : vector<8x32xbf16>, vector<32x32xbf16>, vector<8x32xf32> -> vector<8x32xf32>
    %171 = arith.addf %169, %170 : vector<8x32xf32>
    %172 = arith.negf %171 : vector<8x32xf32>
    %173 = math.exp %172 : vector<8x32xf32>
    %cst_64 = arith.constant 1.000000e+00 : f32
    %174 = vector.broadcast %cst_64 : f32 to vector<8x32xf32>
    %175 = arith.addf %174, %173 : vector<8x32xf32>
    %176 = arith.divf %174, %175 : vector<8x32xf32>
    %177 = arith.mulf %162, %136 : vector<8x32xf32>
    %178 = arith.mulf %153, %167 : vector<8x32xf32>
    %179 = arith.addf %177, %178 : vector<8x32xf32>
    %180 = math.tanh %179 : vector<8x32xf32>
    %181 = arith.mulf %176, %180 : vector<8x32xf32>
    %c3_65 = arith.constant 3 : index
    %c0_66 = arith.constant 0 : index
    %c0_67 = arith.constant 0 : index
    %182 = vector.load %arg4[%c3_65, %c0_66, %c0_67] : memref<8x8x32xf32, #tpu.memory_space<vmem>>, vector<1x8x32xf32>
    %183 = vector.shape_cast %182 : vector<1x8x32xf32> to vector<8x32xf32>
    %184 = vector.shape_cast %181 : vector<8x32xf32> to vector<1x8x32xf32>
    tpu.vector_store %arg4[%c3_65, %c0_66, %c0_67], %184 {strides = array<i32>} : memref<8x8x32xf32, #tpu.memory_space<vmem>>, vector<1x8x32xf32>,
    %c4 = arith.constant 4 : index
    %c0_68 = arith.constant 0 : index
    %c0_69 = arith.constant 0 : index
    %c0_70 = arith.constant 0 : index
    %185 = vector.load %arg2[%c4, %c0_68, %c0_69, %c0_70] : memref<8x4x8x32xf32, #tpu.memory_space<vmem>>, vector<1x4x8x32xf32>
    %186 = vector.shape_cast %185 : vector<1x4x8x32xf32> to vector<4x8x32xf32>
    %187 = arith.truncf %181 : vector<8x32xf32> to vector<8x32xbf16>
    %188 = vector.extract_strided_slice %186 {offsets = [0, 0, 0], sizes = [1, 8, 32], strides = [1, 1, 1]} : vector<4x8x32xf32> to vector<1x8x32xf32>
    %189 = vector.shape_cast %188 : vector<1x8x32xf32> to vector<8x32xf32>
    %cst_71 = arith.constant dense<0.000000e+00> : vector<8x32xf32>
    %190 = tpu.matmul %187, %4, %cst_71 {dimension_numbers = #tpu.dot_dimension_numbers<[1], [0], [0], [1], [0, 0, 1, 1], [], []>} : vector<8x32xbf16>, vector<32x32xbf16>, vector<8x32xf32> -> vector<8x32xf32>
    %191 = arith.addf %189, %190 : vector<8x32xf32>
    %192 = arith.negf %191 : vector<8x32xf32>
    %193 = math.exp %192 : vector<8x32xf32>
    %cst_72 = arith.constant 1.000000e+00 : f32
    %194 = vector.broadcast %cst_72 : f32 to vector<8x32xf32>
    %195 = arith.addf %194, %193 : vector<8x32xf32>
    %196 = arith.divf %194, %195 : vector<8x32xf32>
    %197 = vector.extract_strided_slice %186 {offsets = [1, 0, 0], sizes = [1, 8, 32], strides = [1, 1, 1]} : vector<4x8x32xf32> to vector<1x8x32xf32>
    %198 = vector.shape_cast %197 : vector<1x8x32xf32> to vector<8x32xf32>
    %cst_73 = arith.constant dense<0.000000e+00> : vector<8x32xf32>
    %199 = tpu.matmul %187, %6, %cst_73 {dimension_numbers = #tpu.dot_dimension_numbers<[1], [0], [0], [1], [0, 0, 1, 1], [], []>} : vector<8x32xbf16>, vector<32x32xbf16>, vector<8x32xf32> -> vector<8x32xf32>
    %200 = arith.addf %198, %199 : vector<8x32xf32>
    %201 = arith.negf %200 : vector<8x32xf32>
    %202 = math.exp %201 : vector<8x32xf32>
    %cst_74 = arith.constant 1.000000e+00 : f32
    %203 = vector.broadcast %cst_74 : f32 to vector<8x32xf32>
    %204 = arith.addf %203, %202 : vector<8x32xf32>
    %205 = arith.divf %203, %204 : vector<8x32xf32>
    %206 = vector.extract_strided_slice %186 {offsets = [2, 0, 0], sizes = [1, 8, 32], strides = [1, 1, 1]} : vector<4x8x32xf32> to vector<1x8x32xf32>
    %207 = vector.shape_cast %206 : vector<1x8x32xf32> to vector<8x32xf32>
    %cst_75 = arith.constant dense<0.000000e+00> : vector<8x32xf32>
    %208 = tpu.matmul %187, %8, %cst_75 {dimension_numbers = #tpu.dot_dimension_numbers<[1], [0], [0], [1], [0, 0, 1, 1], [], []>} : vector<8x32xbf16>, vector<32x32xbf16>, vector<8x32xf32> -> vector<8x32xf32>
    %209 = arith.addf %207, %208 : vector<8x32xf32>
    %210 = math.tanh %209 : vector<8x32xf32>
    %211 = vector.extract_strided_slice %186 {offsets = [3, 0, 0], sizes = [1, 8, 32], strides = [1, 1, 1]} : vector<4x8x32xf32> to vector<1x8x32xf32>
    %212 = vector.shape_cast %211 : vector<1x8x32xf32> to vector<8x32xf32>
    %cst_76 = arith.constant dense<0.000000e+00> : vector<8x32xf32>
    %213 = tpu.matmul %187, %10, %cst_76 {dimension_numbers = #tpu.dot_dimension_numbers<[1], [0], [0], [1], [0, 0, 1, 1], [], []>} : vector<8x32xbf16>, vector<32x32xbf16>, vector<8x32xf32> -> vector<8x32xf32>
    %214 = arith.addf %212, %213 : vector<8x32xf32>
    %215 = arith.negf %214 : vector<8x32xf32>
    %216 = math.exp %215 : vector<8x32xf32>
    %cst_77 = arith.constant 1.000000e+00 : f32
    %217 = vector.broadcast %cst_77 : f32 to vector<8x32xf32>
    %218 = arith.addf %217, %216 : vector<8x32xf32>
    %219 = arith.divf %217, %218 : vector<8x32xf32>
    %220 = arith.mulf %205, %179 : vector<8x32xf32>
    %221 = arith.mulf %196, %210 : vector<8x32xf32>
    %222 = arith.addf %220, %221 : vector<8x32xf32>
    %223 = math.tanh %222 : vector<8x32xf32>
    %224 = arith.mulf %219, %223 : vector<8x32xf32>
    %c4_78 = arith.constant 4 : index
    %c0_79 = arith.constant 0 : index
    %c0_80 = arith.constant 0 : index
    %225 = vector.load %arg4[%c4_78, %c0_79, %c0_80] : memref<8x8x32xf32, #tpu.memory_space<vmem>>, vector<1x8x32xf32>
    %226 = vector.shape_cast %225 : vector<1x8x32xf32> to vector<8x32xf32>
    %227 = vector.shape_cast %224 : vector<8x32xf32> to vector<1x8x32xf32>
    tpu.vector_store %arg4[%c4_78, %c0_79, %c0_80], %227 {strides = array<i32>} : memref<8x8x32xf32, #tpu.memory_space<vmem>>, vector<1x8x32xf32>,
    %c5 = arith.constant 5 : index
    %c0_81 = arith.constant 0 : index
    %c0_82 = arith.constant 0 : index
    %c0_83 = arith.constant 0 : index
    %228 = vector.load %arg2[%c5, %c0_81, %c0_82, %c0_83] : memref<8x4x8x32xf32, #tpu.memory_space<vmem>>, vector<1x4x8x32xf32>
    %229 = vector.shape_cast %228 : vector<1x4x8x32xf32> to vector<4x8x32xf32>
    %230 = arith.truncf %224 : vector<8x32xf32> to vector<8x32xbf16>
    %231 = vector.extract_strided_slice %229 {offsets = [0, 0, 0], sizes = [1, 8, 32], strides = [1, 1, 1]} : vector<4x8x32xf32> to vector<1x8x32xf32>
    %232 = vector.shape_cast %231 : vector<1x8x32xf32> to vector<8x32xf32>
    %cst_84 = arith.constant dense<0.000000e+00> : vector<8x32xf32>
    %233 = tpu.matmul %230, %4, %cst_84 {dimension_numbers = #tpu.dot_dimension_numbers<[1], [0], [0], [1], [0, 0, 1, 1], [], []>} : vector<8x32xbf16>, vector<32x32xbf16>, vector<8x32xf32> -> vector<8x32xf32>
    %234 = arith.addf %232, %233 : vector<8x32xf32>
    %235 = arith.negf %234 : vector<8x32xf32>
    %236 = math.exp %235 : vector<8x32xf32>
    %cst_85 = arith.constant 1.000000e+00 : f32
    %237 = vector.broadcast %cst_85 : f32 to vector<8x32xf32>
    %238 = arith.addf %237, %236 : vector<8x32xf32>
    %239 = arith.divf %237, %238 : vector<8x32xf32>
    %240 = vector.extract_strided_slice %229 {offsets = [1, 0, 0], sizes = [1, 8, 32], strides = [1, 1, 1]} : vector<4x8x32xf32> to vector<1x8x32xf32>
    %241 = vector.shape_cast %240 : vector<1x8x32xf32> to vector<8x32xf32>
    %cst_86 = arith.constant dense<0.000000e+00> : vector<8x32xf32>
    %242 = tpu.matmul %230, %6, %cst_86 {dimension_numbers = #tpu.dot_dimension_numbers<[1], [0], [0], [1], [0, 0, 1, 1], [], []>} : vector<8x32xbf16>, vector<32x32xbf16>, vector<8x32xf32> -> vector<8x32xf32>
    %243 = arith.addf %241, %242 : vector<8x32xf32>
    %244 = arith.negf %243 : vector<8x32xf32>
    %245 = math.exp %244 : vector<8x32xf32>
    %cst_87 = arith.constant 1.000000e+00 : f32
    %246 = vector.broadcast %cst_87 : f32 to vector<8x32xf32>
    %247 = arith.addf %246, %245 : vector<8x32xf32>
    %248 = arith.divf %246, %247 : vector<8x32xf32>
    %249 = vector.extract_strided_slice %229 {offsets = [2, 0, 0], sizes = [1, 8, 32], strides = [1, 1, 1]} : vector<4x8x32xf32> to vector<1x8x32xf32>
    %250 = vector.shape_cast %249 : vector<1x8x32xf32> to vector<8x32xf32>
    %cst_88 = arith.constant dense<0.000000e+00> : vector<8x32xf32>
    %251 = tpu.matmul %230, %8, %cst_88 {dimension_numbers = #tpu.dot_dimension_numbers<[1], [0], [0], [1], [0, 0, 1, 1], [], []>} : vector<8x32xbf16>, vector<32x32xbf16>, vector<8x32xf32> -> vector<8x32xf32>
    %252 = arith.addf %250, %251 : vector<8x32xf32>
    %253 = math.tanh %252 : vector<8x32xf32>
    %254 = vector.extract_strided_slice %229 {offsets = [3, 0, 0], sizes = [1, 8, 32], strides = [1, 1, 1]} : vector<4x8x32xf32> to vector<1x8x32xf32>
    %255 = vector.shape_cast %254 : vector<1x8x32xf32> to vector<8x32xf32>
    %cst_89 = arith.constant dense<0.000000e+00> : vector<8x32xf32>
    %256 = tpu.matmul %230, %10, %cst_89 {dimension_numbers = #tpu.dot_dimension_numbers<[1], [0], [0], [1], [0, 0, 1, 1], [], []>} : vector<8x32xbf16>, vector<32x32xbf16>, vector<8x32xf32> -> vector<8x32xf32>
    %257 = arith.addf %255, %256 : vector<8x32xf32>
    %258 = arith.negf %257 : vector<8x32xf32>
    %259 = math.exp %258 : vector<8x32xf32>
    %cst_90 = arith.constant 1.000000e+00 : f32
    %260 = vector.broadcast %cst_90 : f32 to vector<8x32xf32>
    %261 = arith.addf %260, %259 : vector<8x32xf32>
    %262 = arith.divf %260, %261 : vector<8x32xf32>
    %263 = arith.mulf %248, %222 : vector<8x32xf32>
    %264 = arith.mulf %239, %253 : vector<8x32xf32>
    %265 = arith.addf %263, %264 : vector<8x32xf32>
    %266 = math.tanh %265 : vector<8x32xf32>
    %267 = arith.mulf %262, %266 : vector<8x32xf32>
    %c5_91 = arith.constant 5 : index
    %c0_92 = arith.constant 0 : index
    %c0_93 = arith.constant 0 : index
    %268 = vector.load %arg4[%c5_91, %c0_92, %c0_93] : memref<8x8x32xf32, #tpu.memory_space<vmem>>, vector<1x8x32xf32>
    %269 = vector.shape_cast %268 : vector<1x8x32xf32> to vector<8x32xf32>
    %270 = vector.shape_cast %267 : vector<8x32xf32> to vector<1x8x32xf32>
    tpu.vector_store %arg4[%c5_91, %c0_92, %c0_93], %270 {strides = array<i32>} : memref<8x8x32xf32, #tpu.memory_space<vmem>>, vector<1x8x32xf32>,
    %c6 = arith.constant 6 : index
    %c0_94 = arith.constant 0 : index
    %c0_95 = arith.constant 0 : index
    %c0_96 = arith.constant 0 : index
    %271 = vector.load %arg2[%c6, %c0_94, %c0_95, %c0_96] : memref<8x4x8x32xf32, #tpu.memory_space<vmem>>, vector<1x4x8x32xf32>
    %272 = vector.shape_cast %271 : vector<1x4x8x32xf32> to vector<4x8x32xf32>
    %273 = arith.truncf %267 : vector<8x32xf32> to vector<8x32xbf16>
    %274 = vector.extract_strided_slice %272 {offsets = [0, 0, 0], sizes = [1, 8, 32], strides = [1, 1, 1]} : vector<4x8x32xf32> to vector<1x8x32xf32>
    %275 = vector.shape_cast %274 : vector<1x8x32xf32> to vector<8x32xf32>
    %cst_97 = arith.constant dense<0.000000e+00> : vector<8x32xf32>
    %276 = tpu.matmul %273, %4, %cst_97 {dimension_numbers = #tpu.dot_dimension_numbers<[1], [0], [0], [1], [0, 0, 1, 1], [], []>} : vector<8x32xbf16>, vector<32x32xbf16>, vector<8x32xf32> -> vector<8x32xf32>
    %277 = arith.addf %275, %276 : vector<8x32xf32>
    %278 = arith.negf %277 : vector<8x32xf32>
    %279 = math.exp %278 : vector<8x32xf32>
    %cst_98 = arith.constant 1.000000e+00 : f32
    %280 = vector.broadcast %cst_98 : f32 to vector<8x32xf32>
    %281 = arith.addf %280, %279 : vector<8x32xf32>
    %282 = arith.divf %280, %281 : vector<8x32xf32>
    %283 = vector.extract_strided_slice %272 {offsets = [1, 0, 0], sizes = [1, 8, 32], strides = [1, 1, 1]} : vector<4x8x32xf32> to vector<1x8x32xf32>
    %284 = vector.shape_cast %283 : vector<1x8x32xf32> to vector<8x32xf32>
    %cst_99 = arith.constant dense<0.000000e+00> : vector<8x32xf32>
    %285 = tpu.matmul %273, %6, %cst_99 {dimension_numbers = #tpu.dot_dimension_numbers<[1], [0], [0], [1], [0, 0, 1, 1], [], []>} : vector<8x32xbf16>, vector<32x32xbf16>, vector<8x32xf32> -> vector<8x32xf32>
    %286 = arith.addf %284, %285 : vector<8x32xf32>
    %287 = arith.negf %286 : vector<8x32xf32>
    %288 = math.exp %287 : vector<8x32xf32>
    %cst_100 = arith.constant 1.000000e+00 : f32
    %289 = vector.broadcast %cst_100 : f32 to vector<8x32xf32>
    %290 = arith.addf %289, %288 : vector<8x32xf32>
    %291 = arith.divf %289, %290 : vector<8x32xf32>
    %292 = vector.extract_strided_slice %272 {offsets = [2, 0, 0], sizes = [1, 8, 32], strides = [1, 1, 1]} : vector<4x8x32xf32> to vector<1x8x32xf32>
    %293 = vector.shape_cast %292 : vector<1x8x32xf32> to vector<8x32xf32>
    %cst_101 = arith.constant dense<0.000000e+00> : vector<8x32xf32>
    %294 = tpu.matmul %273, %8, %cst_101 {dimension_numbers = #tpu.dot_dimension_numbers<[1], [0], [0], [1], [0, 0, 1, 1], [], []>} : vector<8x32xbf16>, vector<32x32xbf16>, vector<8x32xf32> -> vector<8x32xf32>
    %295 = arith.addf %293, %294 : vector<8x32xf32>
    %296 = math.tanh %295 : vector<8x32xf32>
    %297 = vector.extract_strided_slice %272 {offsets = [3, 0, 0], sizes = [1, 8, 32], strides = [1, 1, 1]} : vector<4x8x32xf32> to vector<1x8x32xf32>
    %298 = vector.shape_cast %297 : vector<1x8x32xf32> to vector<8x32xf32>
    %cst_102 = arith.constant dense<0.000000e+00> : vector<8x32xf32>
    %299 = tpu.matmul %273, %10, %cst_102 {dimension_numbers = #tpu.dot_dimension_numbers<[1], [0], [0], [1], [0, 0, 1, 1], [], []>} : vector<8x32xbf16>, vector<32x32xbf16>, vector<8x32xf32> -> vector<8x32xf32>
    %300 = arith.addf %298, %299 : vector<8x32xf32>
    %301 = arith.negf %300 : vector<8x32xf32>
    %302 = math.exp %301 : vector<8x32xf32>
    %cst_103 = arith.constant 1.000000e+00 : f32
    %303 = vector.broadcast %cst_103 : f32 to vector<8x32xf32>
    %304 = arith.addf %303, %302 : vector<8x32xf32>
    %305 = arith.divf %303, %304 : vector<8x32xf32>
    %306 = arith.mulf %291, %265 : vector<8x32xf32>
    %307 = arith.mulf %282, %296 : vector<8x32xf32>
    %308 = arith.addf %306, %307 : vector<8x32xf32>
    %309 = math.tanh %308 : vector<8x32xf32>
    %310 = arith.mulf %305, %309 : vector<8x32xf32>
    %c6_104 = arith.constant 6 : index
    %c0_105 = arith.constant 0 : index
    %c0_106 = arith.constant 0 : index
    %311 = vector.load %arg4[%c6_104, %c0_105, %c0_106] : memref<8x8x32xf32, #tpu.memory_space<vmem>>, vector<1x8x32xf32>
    %312 = vector.shape_cast %311 : vector<1x8x32xf32> to vector<8x32xf32>
    %313 = vector.shape_cast %310 : vector<8x32xf32> to vector<1x8x32xf32>
    tpu.vector_store %arg4[%c6_104, %c0_105, %c0_106], %313 {strides = array<i32>} : memref<8x8x32xf32, #tpu.memory_space<vmem>>, vector<1x8x32xf32>,
    %c7 = arith.constant 7 : index
    %c0_107 = arith.constant 0 : index
    %c0_108 = arith.constant 0 : index
    %c0_109 = arith.constant 0 : index
    %314 = vector.load %arg2[%c7, %c0_107, %c0_108, %c0_109] : memref<8x4x8x32xf32, #tpu.memory_space<vmem>>, vector<1x4x8x32xf32>
    %315 = vector.shape_cast %314 : vector<1x4x8x32xf32> to vector<4x8x32xf32>
    %316 = arith.truncf %310 : vector<8x32xf32> to vector<8x32xbf16>
    %317 = vector.extract_strided_slice %315 {offsets = [0, 0, 0], sizes = [1, 8, 32], strides = [1, 1, 1]} : vector<4x8x32xf32> to vector<1x8x32xf32>
    %318 = vector.shape_cast %317 : vector<1x8x32xf32> to vector<8x32xf32>
    %cst_110 = arith.constant dense<0.000000e+00> : vector<8x32xf32>
    %319 = tpu.matmul %316, %4, %cst_110 {dimension_numbers = #tpu.dot_dimension_numbers<[1], [0], [0], [1], [0, 0, 1, 1], [], []>} : vector<8x32xbf16>, vector<32x32xbf16>, vector<8x32xf32> -> vector<8x32xf32>
    %320 = arith.addf %318, %319 : vector<8x32xf32>
    %321 = arith.negf %320 : vector<8x32xf32>
    %322 = math.exp %321 : vector<8x32xf32>
    %cst_111 = arith.constant 1.000000e+00 : f32
    %323 = vector.broadcast %cst_111 : f32 to vector<8x32xf32>
    %324 = arith.addf %323, %322 : vector<8x32xf32>
    %325 = arith.divf %323, %324 : vector<8x32xf32>
    %326 = vector.extract_strided_slice %315 {offsets = [1, 0, 0], sizes = [1, 8, 32], strides = [1, 1, 1]} : vector<4x8x32xf32> to vector<1x8x32xf32>
    %327 = vector.shape_cast %326 : vector<1x8x32xf32> to vector<8x32xf32>
    %cst_112 = arith.constant dense<0.000000e+00> : vector<8x32xf32>
    %328 = tpu.matmul %316, %6, %cst_112 {dimension_numbers = #tpu.dot_dimension_numbers<[1], [0], [0], [1], [0, 0, 1, 1], [], []>} : vector<8x32xbf16>, vector<32x32xbf16>, vector<8x32xf32> -> vector<8x32xf32>
    %329 = arith.addf %327, %328 : vector<8x32xf32>
    %330 = arith.negf %329 : vector<8x32xf32>
    %331 = math.exp %330 : vector<8x32xf32>
    %cst_113 = arith.constant 1.000000e+00 : f32
    %332 = vector.broadcast %cst_113 : f32 to vector<8x32xf32>
    %333 = arith.addf %332, %331 : vector<8x32xf32>
    %334 = arith.divf %332, %333 : vector<8x32xf32>
    %335 = vector.extract_strided_slice %315 {offsets = [2, 0, 0], sizes = [1, 8, 32], strides = [1, 1, 1]} : vector<4x8x32xf32> to vector<1x8x32xf32>
    %336 = vector.shape_cast %335 : vector<1x8x32xf32> to vector<8x32xf32>
    %cst_114 = arith.constant dense<0.000000e+00> : vector<8x32xf32>
    %337 = tpu.matmul %316, %8, %cst_114 {dimension_numbers = #tpu.dot_dimension_numbers<[1], [0], [0], [1], [0, 0, 1, 1], [], []>} : vector<8x32xbf16>, vector<32x32xbf16>, vector<8x32xf32> -> vector<8x32xf32>
    %338 = arith.addf %336, %337 : vector<8x32xf32>
    %339 = math.tanh %338 : vector<8x32xf32>
    %340 = vector.extract_strided_slice %315 {offsets = [3, 0, 0], sizes = [1, 8, 32], strides = [1, 1, 1]} : vector<4x8x32xf32> to vector<1x8x32xf32>
    %341 = vector.shape_cast %340 : vector<1x8x32xf32> to vector<8x32xf32>
    %cst_115 = arith.constant dense<0.000000e+00> : vector<8x32xf32>
    %342 = tpu.matmul %316, %10, %cst_115 {dimension_numbers = #tpu.dot_dimension_numbers<[1], [0], [0], [1], [0, 0, 1, 1], [], []>} : vector<8x32xbf16>, vector<32x32xbf16>, vector<8x32xf32> -> vector<8x32xf32>
    %343 = arith.addf %341, %342 : vector<8x32xf32>
    %344 = arith.negf %343 : vector<8x32xf32>
    %345 = math.exp %344 : vector<8x32xf32>
    %cst_116 = arith.constant 1.000000e+00 : f32
    %346 = vector.broadcast %cst_116 : f32 to vector<8x32xf32>
    %347 = arith.addf %346, %345 : vector<8x32xf32>
    %348 = arith.divf %346, %347 : vector<8x32xf32>
    %349 = arith.mulf %334, %308 : vector<8x32xf32>
    %350 = arith.mulf %325, %339 : vector<8x32xf32>
    %351 = arith.addf %349, %350 : vector<8x32xf32>
    %352 = math.tanh %351 : vector<8x32xf32>
    %353 = arith.mulf %348, %352 : vector<8x32xf32>
    %c7_117 = arith.constant 7 : index
    %c0_118 = arith.constant 0 : index
    %c0_119 = arith.constant 0 : index
    %354 = vector.load %arg4[%c7_117, %c0_118, %c0_119] : memref<8x8x32xf32, #tpu.memory_space<vmem>>, vector<1x8x32xf32>
    %355 = vector.shape_cast %354 : vector<1x8x32xf32> to vector<8x32xf32>
    %356 = vector.shape_cast %353 : vector<8x32xf32> to vector<1x8x32xf32>
    tpu.vector_store %arg4[%c7_117, %c0_118, %c0_119], %356 {strides = array<i32>} : memref<8x8x32xf32, #tpu.memory_space<vmem>>, vector<1x8x32xf32>,
    %c0_120 = arith.constant 0 : index
    %c0_121 = arith.constant 0 : index
    %357 = vector.load %arg5[%c0_120, %c0_121] : memref<8x32xf32, #tpu.memory_space<vmem>>, vector<8x32xf32>
    tpu.vector_store %arg5[%c0_120, %c0_121], %353 {strides = array<i32>} : memref<8x32xf32, #tpu.memory_space<vmem>>, vector<8x32xf32>,
    %c0_122 = arith.constant 0 : index
    %c0_123 = arith.constant 0 : index
    %358 = vector.load %arg6[%c0_122, %c0_123] : memref<8x32xf32, #tpu.memory_space<vmem>>, vector<8x32xf32>
    tpu.vector_store %arg6[%c0_122, %c0_123], %351 {strides = array<i32>} : memref<8x32xf32, #tpu.memory_space<vmem>>, vector<8x32xf32>,
    return
  }
  func.func @transform_0(%arg0: i32, %arg1: i32) -> (i32, i32, i32, i32) {
    %c0_i32 = arith.constant 0 : i32
    %c0_i32_0 = arith.constant 0 : i32
    %c0_i32_1 = arith.constant 0 : i32
    return %arg1, %c0_i32, %arg0, %c0_i32_0 : i32, i32, i32, i32
  }
  func.func @transform_1(%arg0: i32, %arg1: i32) -> (i32, i32, i32) {
    %c0_i32 = arith.constant 0 : i32
    %c0_i32_0 = arith.constant 0 : i32
    %c0_i32_1 = arith.constant 0 : i32
    %c0_i32_2 = arith.constant 0 : i32
    return %c0_i32, %c0_i32_0, %c0_i32_1 : i32, i32, i32
  }
  func.func @transform_2(%arg0: i32, %arg1: i32) -> (i32, i32, i32) {
    %c0_i32 = arith.constant 0 : i32
    %c0_i32_0 = arith.constant 0 : i32
    return %arg1, %arg0, %c0_i32 : i32, i32, i32
  }
}

</mosaic_0001>

<llo_original>
// kernel: tpu_custom_call.1
$region0: #{tpu_custom_call.1}
  #allocation0 [shape = 'u32[]', space=smem, size = 0x4, offset = 0x4, fixed_abs, tag = 'smem constant byte address 0x4 - core index']
  #allocation1 [shape = 'u32[144,128]{1,0:T(1,128)}', space=vmem, size = 0x12000, scoped, tag = 'internal scratch']
  #allocation2 [shape = 'f32[8,32]{1,0:T(8,128)}', space=vmem, size = 0x1000, scoped, tag = 'scratch operand']
  #allocation3 [shape = 'f32[8,32]{1,0:T(8,128)}', space=vmem, size = 0x1000, scoped, tag = 'scratch operand']
  %s0 = inlined_call_operand.hbm [shape: f32[16,4,8,32], index: 0, kind: input, shape index: {}]
  %s1 = inlined_call_operand.hbm [shape: bf16[4,32,32], index: 1, kind: input, shape index: {}]
  %s2 = inlined_call_operand.hbm [shape: f32[16,8,32], index: 2, kind: output, shape index: {}]
  %s3 = sld [smem:[#allocation0]]
  $region53: #{tpu_custom_call.1} parent=0
    _
  %s5 = ssub.s32 1, %s3
  %s6 = scalar_select 0, %s5, %s3
  $region1: #{tpu_custom_call.1} parent=0
    #allocation4 [shape = 'u8[262144]{0}', space=vmem, size = 0x40000, scoped, tag = 'input window, operand 0']
    #allocation5 [shape = 's32[2]{0}', space=sflag, size = 0x8, scoped, tag = 'scoped memory for tpu_custom_call.1']
    #allocation6 [shape = 's32[2]{0}', space=sflag, size = 0x8, scoped, tag = 'scoped memory for tpu_custom_call.1']
    #allocation7 [shape = 'u8[32768]{0}', space=vmem, size = 0x8000, scoped, tag = 'input window, operand 1, single buffered']
    #allocation8 [shape = 's32[1]{0}', space=sflag, size = 0x4, scoped, tag = 'scoped memory for tpu_custom_call.1']
    #allocation9 [shape = 'u8[65536]{0}', space=vmem, size = 0x10000, scoped, tag = 'output window, operand 0']
    %7 = vsyncpa [#allocation5], 0
    %s8 = scalar_lea.sflag [#allocation5], 1
    %9 = vsyncpa %s8, 0
    %10 = vsyncpa [#allocation8], 0
    %11 = vsyncpa [#allocation6], 0
    %s12 = scalar_lea.sflag [#allocation6], 1
    %13 = vsyncpa %s12, 0
    loop: start=0, step=1, limit=4
    $region2: #{tpu_custom_call.1} parent=1 // loop_pre_header
      _
    $region3: #{tpu_custom_call.1} parent=1 // loop_header
      %s15 = sphi 0, %s19
      %p16 = scmp.ge.s32.totalorder %s15, 4
      %s22 = sphi 0, %s34
      %s23 = sphi 0, %s30
      %s24 = sphi 0, %s22
      %s25 = sphi 0, %s23
      %s26 = sphi 0, %s24
      %s27 = sphi 0, %s25
      %s39 = sphi 0, %s41
      %s42 = sphi 0, %s39
      %s43 = sphi 0, %s42
      %s59 = sphi 0, %s43
      %s63 = sphi 0, %s63
      %s65 = sphi 0, %s63
      %s66 = sphi 0, %s65
      %s80 = sphi 0, %s66
      %s88 = sphi 0, %s90
      %s91 = sphi 0, %s88
      %s92 = sphi 0, %s91
      %s108 = sphi 0, %s92
    $region4: #{tpu_custom_call.1} parent=1 // loop_header_branch
      %18 = sbr.rel (%p16) target = $region8
    $region5: #{tpu_custom_call.1} parent=1 // loop_body
      %s20 = ssub.s32 %s15, 1
      %s21 = ssub.s32 %s15, 2
      %s28 = sadd.s32 1, %s23
      %p29 = scmp.ge.s32.totalorder %s28, 2
      %s30 = scalar_select %p29, 0, %s28
      %s31 = sadd.s32 1, %s22
      %s32 = scalar_select %p29, %s31, %s22
      %p33 = scmp.ge.s32.totalorder %s32, 1
      %s34 = scalar_select %p33, 0, %s32
      %s35 = ssub.s32 %s23, %s30
      %s36 = ssub.s32 %s22, %s34
      %s37 = sor.u32 %s35, %s36
      %p38 = scmp.eq.s32.totalorder %s37, 0
      %s40 = sadd.s32 %s39, 1
      %s41 = scalar_select %p38, %s39, %s40
      %p44 = pneg %p38
      %p45 = scmp.eq.s32.totalorder %s15, 1
      %p46 = por %p44, %p45
      %p47 = scmp.ne.s32.totalorder %s39, %s42
      %p48 = scmp.eq.s32.totalorder %s15, 0
      %p49 = por %p47, %p48
      %p50 = scmp.ne.s32.totalorder %s39, %s42
      %p51 = scmp.eq.s32.totalorder %s20, 1
      %p52 = por %p50, %p51
      %p53 = scmp.ne.s32.totalorder %s42, %s43
      %p54 = scmp.eq.s32.totalorder %s20, 0
      %p55 = por %p53, %p54
      %p56 = scmp.ne.s32.totalorder %s42, %s43
      %p57 = scmp.eq.s32.totalorder %s21, 1
      %p58 = por %p56, %p57
      %p60 = scmp.ne.s32.totalorder %s43, %s59
      %p61 = scmp.eq.s32.totalorder %s21, 0
      %p62 = por %p60, %p61
      %s64 = sadd.s32 %s63, 1
      %p67 = scmp.eq.s32.totalorder %s15, 1
      %p68 = scmp.ne.s32.totalorder %s63, %s65
      %p69 = scmp.eq.s32.totalorder %s15, 0
      %p70 = por %p68, %p69
      %p71 = scmp.ne.s32.totalorder %s63, %s65
      %p72 = scmp.eq.s32.totalorder %s20, 1
      %p73 = por %p71, %p72
      %p74 = scmp.ne.s32.totalorder %s65, %s66
      %p75 = scmp.eq.s32.totalorder %s20, 0
      %p76 = por %p74, %p75
      %p77 = scmp.ne.s32.totalorder %s65, %s66
      %p78 = scmp.eq.s32.totalorder %s21, 1
      %p79 = por %p77, %p78
      %p81 = scmp.ne.s32.totalorder %s66, %s80
      %p82 = scmp.eq.s32.totalorder %s21, 0
      %p83 = por %p81, %p82
      %s84 = ssub.s32 %s23, %s30
      %s85 = ssub.s32 %s22, %s34
      %s86 = sor.u32 %s84, %s85
      %p87 = scmp.eq.s32.totalorder %s86, 0
      %s89 = sadd.s32 %s88, 1
      %s90 = scalar_select %p87, %s88, %s89
      %p93 = pneg %p87
      %p94 = scmp.eq.s32.totalorder %s15, 1
      %p95 = por %p93, %p94
      %p96 = scmp.ne.s32.totalorder %s88, %s91
      %p97 = scmp.eq.s32.totalorder %s15, 0
      %p98 = por %p96, %p97
      %p99 = scmp.ne.s32.totalorder %s88, %s91
      %p100 = scmp.eq.s32.totalorder %s20, 1
      %p101 = por %p99, %p100
      %p102 = scmp.ne.s32.totalorder %s91, %s92
      %p103 = scmp.eq.s32.totalorder %s20, 0
      %p104 = por %p102, %p103
      %p105 = scmp.ne.s32.totalorder %s91, %s92
      %p106 = scmp.eq.s32.totalorder %s21, 1
      %p107 = por %p105, %p106
      %p109 = scmp.ne.s32.totalorder %s92, %s108
      %p110 = scmp.eq.s32.totalorder %s21, 0
      %p111 = por %p109, %p110
      %p112 = scmp.le.s32.totalorder 1, %s15
      %p113 = scmp.lt.s32.totalorder %s15, 3
      %p114 = pnand %p112, %p113
      %p115 = pneg %p114
      // Predicated region
      $region9: #{tpu_custom_call.1} parent=5 // pred_check
        _
      $region10: #{tpu_custom_call.1} parent=5 // pred_check_branch
        %117 = sbr.rel (%p114) target = $region12
      $region11: #{tpu_custom_call.1} parent=5 // pred_region
        %s118 = ssub.s32 %s15, 1
        // Predicated region
        $region13: #{tpu_custom_call.1} parent=11 // pred_check
          %p119 = pneg %p76
        $region14: #{tpu_custom_call.1} parent=11 // pred_check_branch
          %121 = sbr.rel (%p119) target = $region16
        $region15: #{tpu_custom_call.1} parent=11 // pred_region
          %s123 = ssub.s32 1024, 1024
          %124 = vsyncadd [#allocation8], %s123
          %s125 = sshll.u32 [#allocation7], 4
          %s126 = int_to_ptr.vmem [resolvable:$true] %s125
          %131 = dma.hbm_to_vmem [thread:$0]  %s1, 1024, %s126, [#allocation8], 64, 64, 4
        $region16: #{tpu_custom_call.1} parent=11 // pred_fallthru
          _
      $region12: #{tpu_custom_call.1} parent=5 // pred_fallthru
        _
      %p132 = scmp.lt.s32.totalorder %s15, 2
      // Predicated region
      $region17: #{tpu_custom_call.1} parent=5 // pred_check
        %p133 = pneg %p132
      $region18: #{tpu_custom_call.1} parent=5 // pred_check_branch
        %135 = sbr.rel (%p133) target = $region20
      $region19: #{tpu_custom_call.1} parent=5 // pred_region
        // Predicated region
        $region21: #{tpu_custom_call.1} parent=19 // pred_check
          %p136 = pneg %p49
        $region22: #{tpu_custom_call.1} parent=19 // pred_check_branch
          %138 = sbr.rel (%p136) target = $region24
        $region23: #{tpu_custom_call.1} parent=19 // pred_region
          %s139 = sand.u32 %s39, 1
          %s140 = scalar_lea.sflag [#allocation5], %s139
          %s141 = sand.u32 %s39, 1
          %s142 = smul.addr %s141, 256
          %s143 = scalar_lea.vmem [#allocation4], %s142
          %s144 = smul.u32 8, %s23
          %s146 = ssub.s32 4096, 4096
          %147 = vsyncadd %s140, %s146
          %s148 = smul.addr %s144, 4
          %s149 = sadd.s32 %s22, %s148
          %s150 = smul.addr %s149, 128
          %s151 = scalar_lea.hbm %s0, %s150
          %s152 = sshll.u32 %s143, 4
          %s153 = int_to_ptr.vmem [resolvable:$true] %s152
          %158 = dma.hbm_to_vmem [thread:$0]  %s151, 4096, %s153, %s140, 128, 128, 8
        $region24: #{tpu_custom_call.1} parent=19 // pred_fallthru
          _
      $region20: #{tpu_custom_call.1} parent=5 // pred_fallthru
        _
      %p159 = scmp.le.s32.totalorder 1, %s15
      %p160 = scmp.lt.s32.totalorder %s15, 3
      %p161 = pnand %p159, %p160
      %p162 = pneg %p161
      // Predicated region
      $region25: #{tpu_custom_call.1} parent=5 // pred_check
        _
      $region26: #{tpu_custom_call.1} parent=5 // pred_check_branch
        %164 = sbr.rel (%p161) target = $region28
      $region27: #{tpu_custom_call.1} parent=5 // pred_region
        %s165 = ssub.s32 %s15, 1
        %s166 = sand.u32 %s42, 1
        %s167 = scalar_lea.sflag [#allocation5], %s166
        %s168 = sand.u32 %s42, 1
        %s169 = smul.addr %s168, 256
        %s170 = scalar_lea.vmem [#allocation4], %s169
        // Predicated region
        $region29: #{tpu_custom_call.1} parent=27 // pred_check
          %p171 = pneg %p55
        $region30: #{tpu_custom_call.1} parent=27 // pred_check_branch
          %173 = sbr.rel (%p171) target = $region32
        $region31: #{tpu_custom_call.1} parent=27 // pred_region
          %174 = dma.done %s167, 4096
        $region32: #{tpu_custom_call.1} parent=27 // pred_fallthru
          _
        // Predicated region
        $region33: #{tpu_custom_call.1} parent=27 // pred_check
          %p175 = pneg %p76
        $region34: #{tpu_custom_call.1} parent=27 // pred_check_branch
          %177 = sbr.rel (%p175) target = $region36
        $region35: #{tpu_custom_call.1} parent=27 // pred_region
          %178 = dma.done [#allocation8], 1024
        $region36: #{tpu_custom_call.1} parent=27 // pred_fallthru
          _
        %s179 = sand.u32 %s42, 1
        %s180 = scalar_lea.sflag [#allocation5], %s179
        %s181 = sand.u32 %s42, 1
        %s182 = smul.addr %s181, 256
        %s183 = scalar_lea.vmem [#allocation4], %s182
        %p184 = pneg %p55
        %p185 = pneg %p52
        %p186 = pneg %p76
        %p187 = pneg %p73
        %p188 = pneg %p104
        %p189 = pneg %p101
        %s190 = sand.u32 %s91, 1
        %s191 = scalar_lea.sflag [#allocation6], %s190
        %s192 = sand.u32 %s91, 1
        %s193 = smul.addr %s192, 64
        %s194 = scalar_lea.vmem [#allocation9], %s193
        %s195 = smul.u32 8, %s25
        %s196 = smul.u32 8, %s25
        %p198 = scmp.eq.s32.totalorder %s25, 0
        // Predicated region
        $region37: #{tpu_custom_call.1} parent=27 // pred_check
          %p199 = pneg %p198
        $region38: #{tpu_custom_call.1} parent=27 // pred_check_branch
          %201 = sbr.rel (%p199) target = $region40
        $region39: #{tpu_custom_call.1} parent=27 // pred_region
          %vm202 = vcmask 261120
          %203 = vst.msk [vmem:[#allocation2] sm:$0xff] %vm202, 0.0
          %204 = vst.msk [vmem:[#allocation3] sm:$0xff] %vm202, 0.0
        $region40: #{tpu_custom_call.1} parent=27 // pred_fallthru
          _
        %v205 = vld [vmem:[#allocation7] sm:$0xf]
        %v206 = vld [vmem:[#allocation7 + $0x4] sm:$0xf]
        %v207 = vld [vmem:[#allocation7 + $0x8] sm:$0xf]
        %v208 = vld [vmem:[#allocation7 + $0xc] sm:$0xf]
        %s209 = scalar_lea.vmem [#allocation7], 16
        %v210 = vld [vmem:[%s209] sm:$0xf]
        %v211 = vld [vmem:[%s209 + $0x4] sm:$0xf]
        %v212 = vld [vmem:[%s209 + $0x8] sm:$0xf]
        %v213 = vld [vmem:[%s209 + $0xc] sm:$0xf]
        %s214 = scalar_lea.vmem [#allocation7], 32
        %v215 = vld [vmem:[%s214] sm:$0xf]
        %v216 = vld [vmem:[%s214 + $0x4] sm:$0xf]
        %v217 = vld [vmem:[%s214 + $0x8] sm:$0xf]
        %v218 = vld [vmem:[%s214 + $0xc] sm:$0xf]
        %s219 = scalar_lea.vmem [#allocation7], 48
        %v220 = vld [vmem:[%s219] sm:$0xf]
        %v221 = vld [vmem:[%s219 + $0x4] sm:$0xf]
        %v222 = vld [vmem:[%s219 + $0x8] sm:$0xf]
        %v223 = vld [vmem:[%s219 + $0xc] sm:$0xf]
        %v224 = vld [vmem:[#allocation2] sm:$0xff]
        %v225 = vld [vmem:[#allocation3] sm:$0xff]
        %v226 = vld [vmem:[%s170] sm:$0xff]
        %v227 = vld [vmem:[%s170 + $0x8] sm:$0xff]
        %v228 = vld [vmem:[%s170 + $0x10] sm:$0xff]
        %v229 = vld [vmem:[%s170 + $0x18] sm:$0xff]
        %v230 = vpack.c.bf16 %v224, %v224
        %v235 = vunpack.c.l.b16 %v205
        %v236 = vunpack.c.l.b16 %v206
        %v237 = vunpack.c.l.b16 %v207
        %v238 = vunpack.c.l.b16 %v208
        %v239 = vpack.c.b16 %v236, %v235
        %v240 = vpack.c.b16 %v238, %v237
        %vm243 = vcmask 261120
        %v245 = vsel %vm243, %v230, 0
        %247 = vmatprep.subr.bf16.mxu0 0
        %248 = vmatpush1.bf16.msra.mxu0 0
        %249 = vmatprep.subr.bf16.mxu0 0
        %250 = vmatpush1.bf16.msra.mxu0 0
        %251 = vmatprep.subr.bf16.mxu0 0
        %252 = vmatpush1.bf16.msra.mxu0 0
        %253 = vmatprep.subr.bf16.mxu0 0
        %254 = vmatpush1.bf16.msra.mxu0 0
        %255 = vmatprep.subr.bf16.mxu0 0
        %256 = vmatpush1.bf16.msra.mxu0 0
        %257 = vmatprep.subr.bf16.mxu0 0
        %258 = vmatpush1.bf16.msra.mxu0 0
        %259 = vmatprep.subr.bf16.mxu0 0
        %260 = vmatpush1.bf16.msra.mxu0 %v240
        %261 = vmatprep.subr.bf16.mxu0 0
        %262 = vmatpush1.bf16.msra.mxu0 %v239
        %263 = vmatprep.subr.bf16.mxu0 0
        %264 = vmatpush2.bf16.msra.mxu0 0
        %265 = vmatprep.subr.bf16.mxu0 0
        %266 = vmatpush2.bf16.msra.mxu0 0
        %267 = vmatprep.subr.bf16.mxu0 0
        %268 = vmatpush2.bf16.msra.mxu0 0
        %269 = vmatprep.subr.bf16.mxu0 0
        %270 = vmatpush2.bf16.msra.mxu0 0
        %271 = vmatprep.subr.bf16.mxu0 0
        %272 = vmatpush2.bf16.msra.mxu0 0
        %273 = vmatprep.subr.bf16.mxu0 0
        %274 = vmatpush2.bf16.msra.mxu0 0
        %275 = vmatprep.subr.bf16.mxu0 0
        %276 = vmatpush2.bf16.msra.mxu0 0
        %277 = vmatprep.subr.bf16.mxu0 0
        %278 = vmatpush2.bf16.msra.mxu0 0
        %279 = vmatprep.mubr.bf16.mxu0 0
        %280 = vmatmul.mubr.bf16.gmra.mxu0 %v245
        %v281 = vpop.f32.mrf.mxu0
        %v282 = vadd.f32 0.0, %v281
        %v283 = vpop.f32.mrf.mxu0
        %v284 = vpop.f32.mrf.mxu0
        %v285 = vpop.f32.mrf.mxu0
        %286 = vdwg.mxu0
        %v287 = vadd.f32 %v226, %v282
        %v288 = vxor.u32 %v287, 2147483648
        %v289 = vmul.f32 %v288, 1.442695
        %v290 = vpow.pop %v289
        %v291 = vadd.f32 %v290, 1.0
        %v292 = vrcp.pop %v291
        %v293 = vmul.f32 1.0, %v292
        %v298 = vunpack.c.l.b16 %v210
        %v299 = vunpack.c.l.b16 %v211
        %v300 = vunpack.c.l.b16 %v212
        %v301 = vunpack.c.l.b16 %v213
        %v302 = vpack.c.b16 %v299, %v298
        %v303 = vpack.c.b16 %v301, %v300
        %306 = vmatprep.subr.bf16.mxu0 0
        %307 = vmatpush1.bf16.msra.mxu0 0
        %308 = vmatprep.subr.bf16.mxu0 0
        %309 = vmatpush1.bf16.msra.mxu0 0
        %310 = vmatprep.subr.bf16.mxu0 0
        %311 = vmatpush1.bf16.msra.mxu0 0
        %312 = vmatprep.subr.bf16.mxu0 0
        %313 = vmatpush1.bf16.msra.mxu0 0
        %314 = vmatprep.subr.bf16.mxu0 0
        %315 = vmatpush1.bf16.msra.mxu0 0
        %316 = vmatprep.subr.bf16.mxu0 0
        %317 = vmatpush1.bf16.msra.mxu0 0
        %318 = vmatprep.subr.bf16.mxu0 0
        %319 = vmatpush1.bf16.msra.mxu0 %v303
        %320 = vmatprep.subr.bf16.mxu0 0
        %321 = vmatpush1.bf16.msra.mxu0 %v302
        %322 = vmatprep.subr.bf16.mxu0 0
        %323 = vmatpush2.bf16.msra.mxu0 0
        %324 = vmatprep.subr.bf16.mxu0 0
        %325 = vmatpush2.bf16.msra.mxu0 0
        %326 = vmatprep.subr.bf16.mxu0 0
        %327 = vmatpush2.bf16.msra.mxu0 0
        %328 = vmatprep.subr.bf16.mxu0 0
        %329 = vmatpush2.bf16.msra.mxu0 0
        %330 = vmatprep.subr.bf16.mxu0 0
        %331 = vmatpush2.bf16.msra.mxu0 0
        %332 = vmatprep.subr.bf16.mxu0 0
        %333 = vmatpush2.bf16.msra.mxu0 0
        %334 = vmatprep.subr.bf16.mxu0 0
        %335 = vmatpush2.bf16.msra.mxu0 0
        %336 = vmatprep.subr.bf16.mxu0 0
        %337 = vmatpush2.bf16.msra.mxu0 0
        %338 = vmatprep.mubr.bf16.mxu0 0
        %339 = vmatmul.mubr.bf16.gmra.mxu0 %v245
        %v340 = vpop.f32.mrf.mxu0
        %v341 = vadd.f32 0.0, %v340
        %v342 = vpop.f32.mrf.mxu0
        %v343 = vpop.f32.mrf.mxu0
        %v344 = vpop.f32.mrf.mxu0
        %345 = vdwg.mxu0
        %v346 = vadd.f32 %v227, %v341
        %v347 = vxor.u32 %v346, 2147483648
        %v348 = vmul.f32 %v347, 1.442695
        %v349 = vpow.pop %v348
        %v350 = vadd.f32 %v349, 1.0
        %v351 = vrcp.pop %v350
        %v352 = vmul.f32 1.0, %v351
        %v357 = vunpack.c.l.b16 %v215
        %v358 = vunpack.c.l.b16 %v216
        %v359 = vunpack.c.l.b16 %v217
        %v360 = vunpack.c.l.b16 %v218
        %v361 = vpack.c.b16 %v358, %v357
        %v362 = vpack.c.b16 %v360, %v359
        %365 = vmatprep.subr.bf16.mxu0 0
        %366 = vmatpush1.bf16.msra.mxu0 0
        %367 = vmatprep.subr.bf16.mxu0 0
        %368 = vmatpush1.bf16.msra.mxu0 0
        %369 = vmatprep.subr.bf16.mxu0 0
        %370 = vmatpush1.bf16.msra.mxu0 0
        %371 = vmatprep.subr.bf16.mxu0 0
        %372 = vmatpush1.bf16.msra.mxu0 0
        %373 = vmatprep.subr.bf16.mxu0 0
        %374 = vmatpush1.bf16.msra.mxu0 0
        %375 = vmatprep.subr.bf16.mxu0 0
        %376 = vmatpush1.bf16.msra.mxu0 0
        %377 = vmatprep.subr.bf16.mxu0 0
        %378 = vmatpush1.bf16.msra.mxu0 %v362
        %379 = vmatprep.subr.bf16.mxu0 0
        %380 = vmatpush1.bf16.msra.mxu0 %v361
        %381 = vmatprep.subr.bf16.mxu0 0
        %382 = vmatpush2.bf16.msra.mxu0 0
        %383 = vmatprep.subr.bf16.mxu0 0
        %384 = vmatpush2.bf16.msra.mxu0 0
        %385 = vmatprep.subr.bf16.mxu0 0
        %386 = vmatpush2.bf16.msra.mxu0 0
        %387 = vmatprep.subr.bf16.mxu0 0
        %388 = vmatpush2.bf16.msra.mxu0 0
        %389 = vmatprep.subr.bf16.mxu0 0
        %390 = vmatpush2.bf16.msra.mxu0 0
        %391 = vmatprep.subr.bf16.mxu0 0
        %392 = vmatpush2.bf16.msra.mxu0 0
        %393 = vmatprep.subr.bf16.mxu0 0
        %394 = vmatpush2.bf16.msra.mxu0 0
        %395 = vmatprep.subr.bf16.mxu0 0
        %396 = vmatpush2.bf16.msra.mxu0 0
        %397 = vmatprep.mubr.bf16.mxu0 0
        %398 = vmatmul.mubr.bf16.gmra.mxu0 %v245
        %v399 = vpop.f32.mrf.mxu0
        %v400 = vadd.f32 0.0, %v399
        %v401 = vpop.f32.mrf.mxu0
        %v402 = vpop.f32.mrf.mxu0
        %v403 = vpop.f32.mrf.mxu0
        %404 = vdwg.mxu0
        %v405 = vadd.f32 %v228, %v400
        %v406 = vtanh.pop %v405
        %v411 = vunpack.c.l.b16 %v220
        %v412 = vunpack.c.l.b16 %v221
        %v413 = vunpack.c.l.b16 %v222
        %v414 = vunpack.c.l.b16 %v223
        %v415 = vpack.c.b16 %v412, %v411
        %v416 = vpack.c.b16 %v414, %v413
        %419 = vmatprep.subr.bf16.mxu0 0
        %420 = vmatpush1.bf16.msra.mxu0 0
        %421 = vmatprep.subr.bf16.mxu0 0
        %422 = vmatpush1.bf16.msra.mxu0 0
        %423 = vmatprep.subr.bf16.mxu0 0
        %424 = vmatpush1.bf16.msra.mxu0 0
        %425 = vmatprep.subr.bf16.mxu0 0
        %426 = vmatpush1.bf16.msra.mxu0 0
        %427 = vmatprep.subr.bf16.mxu0 0
        %428 = vmatpush1.bf16.msra.mxu0 0
        %429 = vmatprep.subr.bf16.mxu0 0
        %430 = vmatpush1.bf16.msra.mxu0 0
        %431 = vmatprep.subr.bf16.mxu0 0
        %432 = vmatpush1.bf16.msra.mxu0 %v416
        %433 = vmatprep.subr.bf16.mxu0 0
        %434 = vmatpush1.bf16.msra.mxu0 %v415
        %435 = vmatprep.subr.bf16.mxu0 0
        %436 = vmatpush2.bf16.msra.mxu0 0
        %437 = vmatprep.subr.bf16.mxu0 0
        %438 = vmatpush2.bf16.msra.mxu0 0
        %439 = vmatprep.subr.bf16.mxu0 0
        %440 = vmatpush2.bf16.msra.mxu0 0
        %441 = vmatprep.subr.bf16.mxu0 0
        %442 = vmatpush2.bf16.msra.mxu0 0
        %443 = vmatprep.subr.bf16.mxu0 0
        %444 = vmatpush2.bf16.msra.mxu0 0
        %445 = vmatprep.subr.bf16.mxu0 0
        %446 = vmatpush2.bf16.msra.mxu0 0
        %447 = vmatprep.subr.bf16.mxu0 0
        %448 = vmatpush2.bf16.msra.mxu0 0
        %449 = vmatprep.subr.bf16.mxu0 0
        %450 = vmatpush2.bf16.msra.mxu0 0
        %451 = vmatprep.mubr.bf16.mxu0 0
        %452 = vmatmul.mubr.bf16.gmra.mxu0 %v245
        %v453 = vpop.f32.mrf.mxu0
        %v454 = vadd.f32 0.0, %v453
        %v455 = vpop.f32.mrf.mxu0
        %v456 = vpop.f32.mrf.mxu0
        %v457 = vpop.f32.mrf.mxu0
        %458 = vdwg.mxu0
        %v459 = vadd.f32 %v229, %v454
        %v460 = vxor.u32 %v459, 2147483648
        %v461 = vmul.f32 %v460, 1.442695
        %v462 = vpow.pop %v461
        %v463 = vadd.f32 %v462, 1.0
        %v464 = vrcp.pop %v463
        %v465 = vmul.f32 1.0, %v464
        %v466 = vmul.f32 %v352, %v225
        %v467 = vmul.f32 %v293, %v406
        %v468 = vadd.f32 %v466, %v467
        %v469 = vtanh.pop %v468
        %v470 = vmul.f32 %v465, %v469
        %471 = vst.msk [vmem:[%s194] sm:$0xff] %vm243, %v470
        %s472 = scalar_lea.vmem %s170, 32 [#allocation4]
        %v473 = vld [vmem:[%s472] sm:$0xff]
        %v474 = vld [vmem:[%s472 + $0x8] sm:$0xff]
        %v475 = vld [vmem:[%s472 + $0x10] sm:$0xff]
        %v476 = vld [vmem:[%s472 + $0x18] sm:$0xff]
        %v477 = vpack.c.bf16 %v470, %v470
        %v479 = vsel %vm243, %v477, 0
        %481 = vmatprep.subr.bf16.mxu0 0
        %482 = vmatpush1.bf16.msra.mxu0 0
        %483 = vmatprep.subr.bf16.mxu0 0
        %484 = vmatpush1.bf16.msra.mxu0 0
        %485 = vmatprep.subr.bf16.mxu0 0
        %486 = vmatpush1.bf16.msra.mxu0 0
        %487 = vmatprep.subr.bf16.mxu0 0
        %488 = vmatpush1.bf16.msra.mxu0 0
        %489 = vmatprep.subr.bf16.mxu0 0
        %490 = vmatpush1.bf16.msra.mxu0 0
        %491 = vmatprep.subr.bf16.mxu0 0
        %492 = vmatpush1.bf16.msra.mxu0 0
        %493 = vmatprep.subr.bf16.mxu0 0
        %494 = vmatpush1.bf16.msra.mxu0 %v240
        %495 = vmatprep.subr.bf16.mxu0 0
        %496 = vmatpush1.bf16.msra.mxu0 %v239
        %497 = vmatprep.subr.bf16.mxu0 0
        %498 = vmatpush2.bf16.msra.mxu0 0
        %499 = vmatprep.subr.bf16.mxu0 0
        %500 = vmatpush2.bf16.msra.mxu0 0
        %501 = vmatprep.subr.bf16.mxu0 0
        %502 = vmatpush2.bf16.msra.mxu0 0
        %503 = vmatprep.subr.bf16.mxu0 0
        %504 = vmatpush2.bf16.msra.mxu0 0
        %505 = vmatprep.subr.bf16.mxu0 0
        %506 = vmatpush2.bf16.msra.mxu0 0
        %507 = vmatprep.subr.bf16.mxu0 0
        %508 = vmatpush2.bf16.msra.mxu0 0
        %509 = vmatprep.subr.bf16.mxu0 0
        %510 = vmatpush2.bf16.msra.mxu0 0
        %511 = vmatprep.subr.bf16.mxu0 0
        %512 = vmatpush2.bf16.msra.mxu0 0
        %513 = vmatprep.mubr.bf16.mxu0 0
        %514 = vmatmul.mubr.bf16.gmra.mxu0 %v479
        %v515 = vpop.f32.mrf.mxu0
        %v516 = vadd.f32 0.0, %v515
        %v517 = vpop.f32.mrf.mxu0
        %v518 = vpop.f32.mrf.mxu0
        %v519 = vpop.f32.mrf.mxu0
        %520 = vdwg.mxu0
        %v521 = vadd.f32 %v473, %v516
        %v522 = vxor.u32 %v521, 2147483648
        %v523 = vmul.f32 %v522, 1.442695
        %v524 = vpow.pop %v523
        %v525 = vadd.f32 %v524, 1.0
        %v526 = vrcp.pop %v525
        %v527 = vmul.f32 1.0, %v526
        %528 = vmatprep.subr.bf16.mxu0 0
        %529 = vmatpush1.bf16.msra.mxu0 0
        %530 = vmatprep.subr.bf16.mxu0 0
        %531 = vmatpush1.bf16.msra.mxu0 0
        %532 = vmatprep.subr.bf16.mxu0 0
        %533 = vmatpush1.bf16.msra.mxu0 0
        %534 = vmatprep.subr.bf16.mxu0 0
        %535 = vmatpush1.bf16.msra.mxu0 0
        %536 = vmatprep.subr.bf16.mxu0 0
        %537 = vmatpush1.bf16.msra.mxu0 0
        %538 = vmatprep.subr.bf16.mxu0 0
        %539 = vmatpush1.bf16.msra.mxu0 0
        %540 = vmatprep.subr.bf16.mxu0 0
        %541 = vmatpush1.bf16.msra.mxu0 %v303
        %542 = vmatprep.subr.bf16.mxu0 0
        %543 = vmatpush1.bf16.msra.mxu0 %v302
        %544 = vmatprep.subr.bf16.mxu0 0
        %545 = vmatpush2.bf16.msra.mxu0 0
        %546 = vmatprep.subr.bf16.mxu0 0
        %547 = vmatpush2.bf16.msra.mxu0 0
        %548 = vmatprep.subr.bf16.mxu0 0
        %549 = vmatpush2.bf16.msra.mxu0 0
        %550 = vmatprep.subr.bf16.mxu0 0
        %551 = vmatpush2.bf16.msra.mxu0 0
        %552 = vmatprep.subr.bf16.mxu0 0
        %553 = vmatpush2.bf16.msra.mxu0 0
        %554 = vmatprep.subr.bf16.mxu0 0
        %555 = vmatpush2.bf16.msra.mxu0 0
        %556 = vmatprep.subr.bf16.mxu0 0
        %557 = vmatpush2.bf16.msra.mxu0 0
        %558 = vmatprep.subr.bf16.mxu0 0
        %559 = vmatpush2.bf16.msra.mxu0 0
        %560 = vmatprep.mubr.bf16.mxu0 0
        %561 = vmatmul.mubr.bf16.gmra.mxu0 %v479
        %v562 = vpop.f32.mrf.mxu0
        %v563 = vadd.f32 0.0, %v562
        %v564 = vpop.f32.mrf.mxu0
        %v565 = vpop.f32.mrf.mxu0
        %v566 = vpop.f32.mrf.mxu0
        %567 = vdwg.mxu0
        %v568 = vadd.f32 %v474, %v563
        %v569 = vxor.u32 %v568, 2147483648
        %v570 = vmul.f32 %v569, 1.442695
        %v571 = vpow.pop %v570
        %v572 = vadd.f32 %v571, 1.0
        %v573 = vrcp.pop %v572
        %v574 = vmul.f32 1.0, %v573
        %575 = vmatprep.subr.bf16.mxu0 0
        %576 = vmatpush1.bf16.msra.mxu0 0
        %577 = vmatprep.subr.bf16.mxu0 0
        %578 = vmatpush1.bf16.msra.mxu0 0
        %579 = vmatprep.subr.bf16.mxu0 0
        %580 = vmatpush1.bf16.msra.mxu0 0
        %581 = vmatprep.subr.bf16.mxu0 0
        %582 = vmatpush1.bf16.msra.mxu0 0
        %583 = vmatprep.subr.bf16.mxu0 0
        %584 = vmatpush1.bf16.msra.mxu0 0
        %585 = vmatprep.subr.bf16.mxu0 0
        %586 = vmatpush1.bf16.msra.mxu0 0
        %587 = vmatprep.subr.bf16.mxu0 0
        %588 = vmatpush1.bf16.msra.mxu0 %v362
        %589 = vmatprep.subr.bf16.mxu0 0
        %590 = vmatpush1.bf16.msra.mxu0 %v361
        %591 = vmatprep.subr.bf16.mxu0 0
        %592 = vmatpush2.bf16.msra.mxu0 0
        %593 = vmatprep.subr.bf16.mxu0 0
        %594 = vmatpush2.bf16.msra.mxu0 0
        %595 = vmatprep.subr.bf16.mxu0 0
        %596 = vmatpush2.bf16.msra.mxu0 0
        %597 = vmatprep.subr.bf16.mxu0 0
        %598 = vmatpush2.bf16.msra.mxu0 0
        %599 = vmatprep.subr.bf16.mxu0 0
        %600 = vmatpush2.bf16.msra.mxu0 0
        %601 = vmatprep.subr.bf16.mxu0 0
        %602 = vmatpush2.bf16.msra.mxu0 0
        %603 = vmatprep.subr.bf16.mxu0 0
        %604 = vmatpush2.bf16.msra.mxu0 0
        %605 = vmatprep.subr.bf16.mxu0 0
        %606 = vmatpush2.bf16.msra.mxu0 0
        %607 = vmatprep.mubr.bf16.mxu0 0
        %608 = vmatmul.mubr.bf16.gmra.mxu0 %v479
        %v609 = vpop.f32.mrf.mxu0
        %v610 = vadd.f32 0.0, %v609
        %v611 = vpop.f32.mrf.mxu0
        %v612 = vpop.f32.mrf.mxu0
        %v613 = vpop.f32.mrf.mxu0
        %614 = vdwg.mxu0
        %v615 = vadd.f32 %v475, %v610
        %v616 = vtanh.pop %v615
        %617 = vmatprep.subr.bf16.mxu0 0
        %618 = vmatpush1.bf16.msra.mxu0 0
        %619 = vmatprep.subr.bf16.mxu0 0
        %620 = vmatpush1.bf16.msra.mxu0 0
        %621 = vmatprep.subr.bf16.mxu0 0
        %622 = vmatpush1.bf16.msra.mxu0 0
        %623 = vmatprep.subr.bf16.mxu0 0
        %624 = vmatpush1.bf16.msra.mxu0 0
        %625 = vmatprep.subr.bf16.mxu0 0
        %626 = vmatpush1.bf16.msra.mxu0 0
        %627 = vmatprep.subr.bf16.mxu0 0
        %628 = vmatpush1.bf16.msra.mxu0 0
        %629 = vmatprep.subr.bf16.mxu0 0
        %630 = vmatpush1.bf16.msra.mxu0 %v416
        %631 = vmatprep.subr.bf16.mxu0 0
        %632 = vmatpush1.bf16.msra.mxu0 %v415
        %633 = vmatprep.subr.bf16.mxu0 0
        %634 = vmatpush2.bf16.msra.mxu0 0
        %635 = vmatprep.subr.bf16.mxu0 0
        %636 = vmatpush2.bf16.msra.mxu0 0
        %637 = vmatprep.subr.bf16.mxu0 0
        %638 = vmatpush2.bf16.msra.mxu0 0
        %639 = vmatprep.subr.bf16.mxu0 0
        %640 = vmatpush2.bf16.msra.mxu0 0
        %641 = vmatprep.subr.bf16.mxu0 0
        %642 = vmatpush2.bf16.msra.mxu0 0
        %643 = vmatprep.subr.bf16.mxu0 0
        %644 = vmatpush2.bf16.msra.mxu0 0
        %645 = vmatprep.subr.bf16.mxu0 0
        %646 = vmatpush2.bf16.msra.mxu0 0
        %647 = vmatprep.subr.bf16.mxu0 0
        %648 = vmatpush2.bf16.msra.mxu0 0
        %649 = vmatprep.mubr.bf16.mxu0 0
        %650 = vmatmul.mubr.bf16.gmra.mxu0 %v479
        %v651 = vpop.f32.mrf.mxu0
        %v652 = vadd.f32 0.0, %v651
        %v653 = vpop.f32.mrf.mxu0
        %v654 = vpop.f32.mrf.mxu0
        %v655 = vpop.f32.mrf.mxu0
        %656 = vdwg.mxu0
        %v657 = vadd.f32 %v476, %v652
        %v658 = vxor.u32 %v657, 2147483648
        %v659 = vmul.f32 %v658, 1.442695
        %v660 = vpow.pop %v659
        %v661 = vadd.f32 %v660, 1.0
        %v662 = vrcp.pop %v661
        %v663 = vmul.f32 1.0, %v662
        %v664 = vmul.f32 %v574, %v468
        %v665 = vmul.f32 %v527, %v616
        %v666 = vadd.f32 %v664, %v665
        %v667 = vtanh.pop %v666
        %v668 = vmul.f32 %v663, %v667
        %s669 = scalar_lea.vmem %s194, 8 [#allocation9]
        %670 = vst.msk [vmem:[%s669] sm:$0xff] %vm243, %v668
        %s671 = scalar_lea.vmem %s170, 64 [#allocation4]
        %v672 = vld [vmem:[%s671] sm:$0xff]
        %v673 = vld [vmem:[%s671 + $0x8] sm:$0xff]
        %v674 = vld [vmem:[%s671 + $0x10] sm:$0xff]
        %v675 = vld [vmem:[%s671 + $0x18] sm:$0xff]
        %v676 = vpack.c.bf16 %v668, %v668
        %v678 = vsel %vm243, %v676, 0
        %680 = vmatprep.subr.bf16.mxu0 0
        %681 = vmatpush1.bf16.msra.mxu0 0
        %682 = vmatprep.subr.bf16.mxu0 0
        %683 = vmatpush1.bf16.msra.mxu0 0
        %684 = vmatprep.subr.bf16.mxu0 0
        %685 = vmatpush1.bf16.msra.mxu0 0
        %686 = vmatprep.subr.bf16.mxu0 0
        %687 = vmatpush1.bf16.msra.mxu0 0
        %688 = vmatprep.subr.bf16.mxu0 0
        %689 = vmatpush1.bf16.msra.mxu0 0
        %690 = vmatprep.subr.bf16.mxu0 0
        %691 = vmatpush1.bf16.msra.mxu0 0
        %692 = vmatprep.subr.bf16.mxu0 0
        %693 = vmatpush1.bf16.msra.mxu0 %v240
        %694 = vmatprep.subr.bf16.mxu0 0
        %695 = vmatpush1.bf16.msra.mxu0 %v239
        %696 = vmatprep.subr.bf16.mxu0 0
        %697 = vmatpush2.bf16.msra.mxu0 0
        %698 = vmatprep.subr.bf16.mxu0 0
        %699 = vmatpush2.bf16.msra.mxu0 0
        %700 = vmatprep.subr.bf16.mxu0 0
        %701 = vmatpush2.bf16.msra.mxu0 0
        %702 = vmatprep.subr.bf16.mxu0 0
        %703 = vmatpush2.bf16.msra.mxu0 0
        %704 = vmatprep.subr.bf16.mxu0 0
        %705 = vmatpush2.bf16.msra.mxu0 0
        %706 = vmatprep.subr.bf16.mxu0 0
        %707 = vmatpush2.bf16.msra.mxu0 0
        %708 = vmatprep.subr.bf16.mxu0 0
        %709 = vmatpush2.bf16.msra.mxu0 0
        %710 = vmatprep.subr.bf16.mxu0 0
        %711 = vmatpush2.bf16.msra.mxu0 0
        %712 = vmatprep.mubr.bf16.mxu0 0
        %713 = vmatmul.mubr.bf16.gmra.mxu0 %v678
        %v714 = vpop.f32.mrf.mxu0
        %v715 = vadd.f32 0.0, %v714
        %v716 = vpop.f32.mrf.mxu0
        %v717 = vpop.f32.mrf.mxu0
        %v718 = vpop.f32.mrf.mxu0
        %719 = vdwg.mxu0
        %v720 = vadd.f32 %v672, %v715
        %v721 = vxor.u32 %v720, 2147483648
        %v722 = vmul.f32 %v721, 1.442695
        %v723 = vpow.pop %v722
        %v724 = vadd.f32 %v723, 1.0
        %v725 = vrcp.pop %v724
        %v726 = vmul.f32 1.0, %v725
        %727 = vmatprep.subr.bf16.mxu0 0
        %728 = vmatpush1.bf16.msra.mxu0 0
        %729 = vmatprep.subr.bf16.mxu0 0
        %730 = vmatpush1.bf16.msra.mxu0 0
        %731 = vmatprep.subr.bf16.mxu0 0
        %732 = vmatpush1.bf16.msra.mxu0 0
        %733 = vmatprep.subr.bf16.mxu0 0
        %734 = vmatpush1.bf16.msra.mxu0 0
        %735 = vmatprep.subr.bf16.mxu0 0
        %736 = vmatpush1.bf16.msra.mxu0 0
        %737 = vmatprep.subr.bf16.mxu0 0
        %738 = vmatpush1.bf16.msra.mxu0 0
        %739 = vmatprep.subr.bf16.mxu0 0
        %740 = vmatpush1.bf16.msra.mxu0 %v303
        %741 = vmatprep.subr.bf16.mxu0 0
        %742 = vmatpush1.bf16.msra.mxu0 %v302
        %743 = vmatprep.subr.bf16.mxu0 0
        %744 = vmatpush2.bf16.msra.mxu0 0
        %745 = vmatprep.subr.bf16.mxu0 0
        %746 = vmatpush2.bf16.msra.mxu0 0
        %747 = vmatprep.subr.bf16.mxu0 0
        %748 = vmatpush2.bf16.msra.mxu0 0
        %749 = vmatprep.subr.bf16.mxu0 0
        %750 = vmatpush2.bf16.msra.mxu0 0
        %751 = vmatprep.subr.bf16.mxu0 0
        %752 = vmatpush2.bf16.msra.mxu0 0
        %753 = vmatprep.subr.bf16.mxu0 0
        %754 = vmatpush2.bf16.msra.mxu0 0
        %755 = vmatprep.subr.bf16.mxu0 0
        %756 = vmatpush2.bf16.msra.mxu0 0
        %757 = vmatprep.subr.bf16.mxu0 0
        %758 = vmatpush2.bf16.msra.mxu0 0
        %759 = vmatprep.mubr.bf16.mxu0 0
        %760 = vmatmul.mubr.bf16.gmra.mxu0 %v678
        %v761 = vpop.f32.mrf.mxu0
        %v762 = vadd.f32 0.0, %v761
        %v763 = vpop.f32.mrf.mxu0
        %v764 = vpop.f32.mrf.mxu0
        %v765 = vpop.f32.mrf.mxu0
        %766 = vdwg.mxu0
        %v767 = vadd.f32 %v673, %v762
        %v768 = vxor.u32 %v767, 2147483648
        %v769 = vmul.f32 %v768, 1.442695
        %v770 = vpow.pop %v769
        %v771 = vadd.f32 %v770, 1.0
        %v772 = vrcp.pop %v771
        %v773 = vmul.f32 1.0, %v772
        %774 = vmatprep.subr.bf16.mxu0 0
        %775 = vmatpush1.bf16.msra.mxu0 0
        %776 = vmatprep.subr.bf16.mxu0 0
        %777 = vmatpush1.bf16.msra.mxu0 0
        %778 = vmatprep.subr.bf16.mxu0 0
        %779 = vmatpush1.bf16.msra.mxu0 0
        %780 = vmatprep.subr.bf16.mxu0 0
        %781 = vmatpush1.bf16.msra.mxu0 0
        %782 = vmatprep.subr.bf16.mxu0 0
        %783 = vmatpush1.bf16.msra.mxu0 0
        %784 = vmatprep.subr.bf16.mxu0 0
        %785 = vmatpush1.bf16.msra.mxu0 0
        %786 = vmatprep.subr.bf16.mxu0 0
        %787 = vmatpush1.bf16.msra.mxu0 %v362
        %788 = vmatprep.subr.bf16.mxu0 0
        %789 = vmatpush1.bf16.msra.mxu0 %v361
        %790 = vmatprep.subr.bf16.mxu0 0
        %791 = vmatpush2.bf16.msra.mxu0 0
        %792 = vmatprep.subr.bf16.mxu0 0
        %793 = vmatpush2.bf16.msra.mxu0 0
        %794 = vmatprep.subr.bf16.mxu0 0
        %795 = vmatpush2.bf16.msra.mxu0 0
        %796 = vmatprep.subr.bf16.mxu0 0
        %797 = vmatpush2.bf16.msra.mxu0 0
        %798 = vmatprep.subr.bf16.mxu0 0
        %799 = vmatpush2.bf16.msra.mxu0 0
        %800 = vmatprep.subr.bf16.mxu0 0
        %801 = vmatpush2.bf16.msra.mxu0 0
        %802 = vmatprep.subr.bf16.mxu0 0
        %803 = vmatpush2.bf16.msra.mxu0 0
        %804 = vmatprep.subr.bf16.mxu0 0
        %805 = vmatpush2.bf16.msra.mxu0 0
        %806 = vmatprep.mubr.bf16.mxu0 0
        %807 = vmatmul.mubr.bf16.gmra.mxu0 %v678
        %v808 = vpop.f32.mrf.mxu0
        %v809 = vadd.f32 0.0, %v808
        %v810 = vpop.f32.mrf.mxu0
        %v811 = vpop.f32.mrf.mxu0
        %v812 = vpop.f32.mrf.mxu0
        %813 = vdwg.mxu0
        %v814 = vadd.f32 %v674, %v809
        %v815 = vtanh.pop %v814
        %816 = vmatprep.subr.bf16.mxu0 0
        %817 = vmatpush1.bf16.msra.mxu0 0
        %818 = vmatprep.subr.bf16.mxu0 0
        %819 = vmatpush1.bf16.msra.mxu0 0
        %820 = vmatprep.subr.bf16.mxu0 0
        %821 = vmatpush1.bf16.msra.mxu0 0
        %822 = vmatprep.subr.bf16.mxu0 0
        %823 = vmatpush1.bf16.msra.mxu0 0
        %824 = vmatprep.subr.bf16.mxu0 0
        %825 = vmatpush1.bf16.msra.mxu0 0
        %826 = vmatprep.subr.bf16.mxu0 0
        %827 = vmatpush1.bf16.msra.mxu0 0
        %828 = vmatprep.subr.bf16.mxu0 0
        %829 = vmatpush1.bf16.msra.mxu0 %v416
        %830 = vmatprep.subr.bf16.mxu0 0
        %831 = vmatpush1.bf16.msra.mxu0 %v415
        %832 = vmatprep.subr.bf16.mxu0 0
        %833 = vmatpush2.bf16.msra.mxu0 0
        %834 = vmatprep.subr.bf16.mxu0 0
        %835 = vmatpush2.bf16.msra.mxu0 0
        %836 = vmatprep.subr.bf16.mxu0 0
        %837 = vmatpush2.bf16.msra.mxu0 0
        %838 = vmatprep.subr.bf16.mxu0 0
        %839 = vmatpush2.bf16.msra.mxu0 0
        %840 = vmatprep.subr.bf16.mxu0 0
        %841 = vmatpush2.bf16.msra.mxu0 0
        %842 = vmatprep.subr.bf16.mxu0 0
        %843 = vmatpush2.bf16.msra.mxu0 0
        %844 = vmatprep.subr.bf16.mxu0 0
        %845 = vmatpush2.bf16.msra.mxu0 0
        %846 = vmatprep.subr.bf16.mxu0 0
        %847 = vmatpush2.bf16.msra.mxu0 0
        %848 = vmatprep.mubr.bf16.mxu0 0
        %849 = vmatmul.mubr.bf16.gmra.mxu0 %v678
        %v850 = vpop.f32.mrf.mxu0
        %v851 = vadd.f32 0.0, %v850
        %v852 = vpop.f32.mrf.mxu0
        %v853 = vpop.f32.mrf.mxu0
        %v854 = vpop.f32.mrf.mxu0
        %855 = vdwg.mxu0
        %v856 = vadd.f32 %v675, %v851
        %v857 = vxor.u32 %v856, 2147483648
        %v858 = vmul.f32 %v857, 1.442695
        %v859 = vpow.pop %v858
        %v860 = vadd.f32 %v859, 1.0
        %v861 = vrcp.pop %v860
        %v862 = vmul.f32 1.0, %v861
        %v863 = vmul.f32 %v773, %v666
        %v864 = vmul.f32 %v726, %v815
        %v865 = vadd.f32 %v863, %v864
        %v866 = vtanh.pop %v865
        %v867 = vmul.f32 %v862, %v866
        %s868 = scalar_lea.vmem %s194, 16 [#allocation9]
        %869 = vst.msk [vmem:[%s868] sm:$0xff] %vm243, %v867
        %s870 = scalar_lea.vmem %s170, 96 [#allocation4]
        %v871 = vld [vmem:[%s870] sm:$0xff]
        %v872 = vld [vmem:[%s870 + $0x8] sm:$0xff]
        %v873 = vld [vmem:[%s870 + $0x10] sm:$0xff]
        %v874 = vld [vmem:[%s870 + $0x18] sm:$0xff]
        %v875 = vpack.c.bf16 %v867, %v867
        %v877 = vsel %vm243, %v875, 0
        %879 = vmatprep.subr.bf16.mxu0 0
        %880 = vmatpush1.bf16.msra.mxu0 0
        %881 = vmatprep.subr.bf16.mxu0 0
        %882 = vmatpush1.bf16.msra.mxu0 0
        %883 = vmatprep.subr.bf16.mxu0 0
        %884 = vmatpush1.bf16.msra.mxu0 0
        %885 = vmatprep.subr.bf16.mxu0 0
        %886 = vmatpush1.bf16.msra.mxu0 0
        %887 = vmatprep.subr.bf16.mxu0 0
        %888 = vmatpush1.bf16.msra.mxu0 0
        %889 = vmatprep.subr.bf16.mxu0 0
        %890 = vmatpush1.bf16.msra.mxu0 0
        %891 = vmatprep.subr.bf16.mxu0 0
        %892 = vmatpush1.bf16.msra.mxu0 %v240
        %893 = vmatprep.subr.bf16.mxu0 0
        %894 = vmatpush1.bf16.msra.mxu0 %v239
        %895 = vmatprep.subr.bf16.mxu0 0
        %896 = vmatpush2.bf16.msra.mxu0 0
        %897 = vmatprep.subr.bf16.mxu0 0
        %898 = vmatpush2.bf16.msra.mxu0 0
        %899 = vmatprep.subr.bf16.mxu0 0
        %900 = vmatpush2.bf16.msra.mxu0 0
        %901 = vmatprep.subr.bf16.mxu0 0
        %902 = vmatpush2.bf16.msra.mxu0 0
        %903 = vmatprep.subr.bf16.mxu0 0
        %904 = vmatpush2.bf16.msra.mxu0 0
        %905 = vmatprep.subr.bf16.mxu0 0
        %906 = vmatpush2.bf16.msra.mxu0 0
        %907 = vmatprep.subr.bf16.mxu0 0
        %908 = vmatpush2.bf16.msra.mxu0 0
        %909 = vmatprep.subr.bf16.mxu0 0
        %910 = vmatpush2.bf16.msra.mxu0 0
        %911 = vmatprep.mubr.bf16.mxu0 0
        %912 = vmatmul.mubr.bf16.gmra.mxu0 %v877
        %v913 = vpop.f32.mrf.mxu0
        %v914 = vadd.f32 0.0, %v913
        %v915 = vpop.f32.mrf.mxu0
        %v916 = vpop.f32.mrf.mxu0
        %v917 = vpop.f32.mrf.mxu0
        %918 = vdwg.mxu0
        %v919 = vadd.f32 %v871, %v914
        %v920 = vxor.u32 %v919, 2147483648
        %v921 = vmul.f32 %v920, 1.442695
        %v922 = vpow.pop %v921
        %v923 = vadd.f32 %v922, 1.0
        %v924 = vrcp.pop %v923
        %v925 = vmul.f32 1.0, %v924
        %926 = vmatprep.subr.bf16.mxu0 0
        %927 = vmatpush1.bf16.msra.mxu0 0
        %928 = vmatprep.subr.bf16.mxu0 0
        %929 = vmatpush1.bf16.msra.mxu0 0
        %930 = vmatprep.subr.bf16.mxu0 0
        %931 = vmatpush1.bf16.msra.mxu0 0
        %932 = vmatprep.subr.bf16.mxu0 0
        %933 = vmatpush1.bf16.msra.mxu0 0
        %934 = vmatprep.subr.bf16.mxu0 0
        %935 = vmatpush1.bf16.msra.mxu0 0
        %936 = vmatprep.subr.bf16.mxu0 0
        %937 = vmatpush1.bf16.msra.mxu0 0
        %938 = vmatprep.subr.bf16.mxu0 0
        %939 = vmatpush1.bf16.msra.mxu0 %v303
        %940 = vmatprep.subr.bf16.mxu0 0
        %941 = vmatpush1.bf16.msra.mxu0 %v302
        %942 = vmatprep.subr.bf16.mxu0 0
        %943 = vmatpush2.bf16.msra.mxu0 0
        %944 = vmatprep.subr.bf16.mxu0 0
        %945 = vmatpush2.bf16.msra.mxu0 0
        %946 = vmatprep.subr.bf16.mxu0 0
        %947 = vmatpush2.bf16.msra.mxu0 0
        %948 = vmatprep.subr.bf16.mxu0 0
        %949 = vmatpush2.bf16.msra.mxu0 0
        %950 = vmatprep.subr.bf16.mxu0 0
        %951 = vmatpush2.bf16.msra.mxu0 0
        %952 = vmatprep.subr.bf16.mxu0 0
        %953 = vmatpush2.bf16.msra.mxu0 0
        %954 = vmatprep.subr.bf16.mxu0 0
        %955 = vmatpush2.bf16.msra.mxu0 0
        %956 = vmatprep.subr.bf16.mxu0 0
        %957 = vmatpush2.bf16.msra.mxu0 0
        %958 = vmatprep.mubr.bf16.mxu0 0
        %959 = vmatmul.mubr.bf16.gmra.mxu0 %v877
        %v960 = vpop.f32.mrf.mxu0
        %v961 = vadd.f32 0.0, %v960
        %v962 = vpop.f32.mrf.mxu0
        %v963 = vpop.f32.mrf.mxu0
        %v964 = vpop.f32.mrf.mxu0
        %965 = vdwg.mxu0
        %v966 = vadd.f32 %v872, %v961
        %v967 = vxor.u32 %v966, 2147483648
        %v968 = vmul.f32 %v967, 1.442695
        %v969 = vpow.pop %v968
        %v970 = vadd.f32 %v969, 1.0
        %v971 = vrcp.pop %v970
        %v972 = vmul.f32 1.0, %v971
        %973 = vmatprep.subr.bf16.mxu0 0
        %974 = vmatpush1.bf16.msra.mxu0 0
        %975 = vmatprep.subr.bf16.mxu0 0
        %976 = vmatpush1.bf16.msra.mxu0 0
        %977 = vmatprep.subr.bf16.mxu0 0
        %978 = vmatpush1.bf16.msra.mxu0 0
        %979 = vmatprep.subr.bf16.mxu0 0
        %980 = vmatpush1.bf16.msra.mxu0 0
        %981 = vmatprep.subr.bf16.mxu0 0
        %982 = vmatpush1.bf16.msra.mxu0 0
        %983 = vmatprep.subr.bf16.mxu0 0
        %984 = vmatpush1.bf16.msra.mxu0 0
        %985 = vmatprep.subr.bf16.mxu0 0
        %986 = vmatpush1.bf16.msra.mxu0 %v362
        %987 = vmatprep.subr.bf16.mxu0 0
        %988 = vmatpush1.bf16.msra.mxu0 %v361
        %989 = vmatprep.subr.bf16.mxu0 0
        %990 = vmatpush2.bf16.msra.mxu0 0
        %991 = vmatprep.subr.bf16.mxu0 0
        %992 = vmatpush2.bf16.msra.mxu0 0
        %993 = vmatprep.subr.bf16.mxu0 0
        %994 = vmatpush2.bf16.msra.mxu0 0
        %995 = vmatprep.subr.bf16.mxu0 0
        %996 = vmatpush2.bf16.msra.mxu0 0
        %997 = vmatprep.subr.bf16.mxu0 0
        %998 = vmatpush2.bf16.msra.mxu0 0
        %999 = vmatprep.subr.bf16.mxu0 0
        %1000 = vmatpush2.bf16.msra.mxu0 0
        %1001 = vmatprep.subr.bf16.mxu0 0
        %1002 = vmatpush2.bf16.msra.mxu0 0
        %1003 = vmatprep.subr.bf16.mxu0 0
        %1004 = vmatpush2.bf16.msra.mxu0 0
        %1005 = vmatprep.mubr.bf16.mxu0 0
        %1006 = vmatmul.mubr.bf16.gmra.mxu0 %v877
        %v1007 = vpop.f32.mrf.mxu0
        %v1008 = vadd.f32 0.0, %v1007
        %v1009 = vpop.f32.mrf.mxu0
        %v1010 = vpop.f32.mrf.mxu0
        %v1011 = vpop.f32.mrf.mxu0
        %1012 = vdwg.mxu0
        %v1013 = vadd.f32 %v873, %v1008
        %v1014 = vtanh.pop %v1013
        %1015 = vmatprep.subr.bf16.mxu0 0
        %1016 = vmatpush1.bf16.msra.mxu0 0
        %1017 = vmatprep.subr.bf16.mxu0 0
        %1018 = vmatpush1.bf16.msra.mxu0 0
        %1019 = vmatprep.subr.bf16.mxu0 0
        %1020 = vmatpush1.bf16.msra.mxu0 0
        %1021 = vmatprep.subr.bf16.mxu0 0
        %1022 = vmatpush1.bf16.msra.mxu0 0
        %1023 = vmatprep.subr.bf16.mxu0 0
        %1024 = vmatpush1.bf16.msra.mxu0 0
        %1025 = vmatprep.subr.bf16.mxu0 0
        %1026 = vmatpush1.bf16.msra.mxu0 0
        %1027 = vmatprep.subr.bf16.mxu0 0
        %1028 = vmatpush1.bf16.msra.mxu0 %v416
        %1029 = vmatprep.subr.bf16.mxu0 0
        %1030 = vmatpush1.bf16.msra.mxu0 %v415
        %1031 = vmatprep.subr.bf16.mxu0 0
        %1032 = vmatpush2.bf16.msra.mxu0 0
        %1033 = vmatprep.subr.bf16.mxu0 0
        %1034 = vmatpush2.bf16.msra.mxu0 0
        %1035 = vmatprep.subr.bf16.mxu0 0
        %1036 = vmatpush2.bf16.msra.mxu0 0
        %1037 = vmatprep.subr.bf16.mxu0 0
        %1038 = vmatpush2.bf16.msra.mxu0 0
        %1039 = vmatprep.subr.bf16.mxu0 0
        %1040 = vmatpush2.bf16.msra.mxu0 0
        %1041 = vmatprep.subr.bf16.mxu0 0
        %1042 = vmatpush2.bf16.msra.mxu0 0
        %1043 = vmatprep.subr.bf16.mxu0 0
        %1044 = vmatpush2.bf16.msra.mxu0 0
        %1045 = vmatprep.subr.bf16.mxu0 0
        %1046 = vmatpush2.bf16.msra.mxu0 0
        %1047 = vmatprep.mubr.bf16.mxu0 0
        %1048 = vmatmul.mubr.bf16.gmra.mxu0 %v877
        %v1049 = vpop.f32.mrf.mxu0
        %v1050 = vadd.f32 0.0, %v1049
        %v1051 = vpop.f32.mrf.mxu0
        %v1052 = vpop.f32.mrf.mxu0
        %v1053 = vpop.f32.mrf.mxu0
        %1054 = vdwg.mxu0
        %v1055 = vadd.f32 %v874, %v1050
        %v1056 = vxor.u32 %v1055, 2147483648
        %v1057 = vmul.f32 %v1056, 1.442695
        %v1058 = vpow.pop %v1057
        %v1059 = vadd.f32 %v1058, 1.0
        %v1060 = vrcp.pop %v1059
        %v1061 = vmul.f32 1.0, %v1060
        %v1062 = vmul.f32 %v972, %v865
        %v1063 = vmul.f32 %v925, %v1014
        %v1064 = vadd.f32 %v1062, %v1063
        %v1065 = vtanh.pop %v1064
        %v1066 = vmul.f32 %v1061, %v1065
        %s1067 = scalar_lea.vmem %s194, 24 [#allocation9]
        %1068 = vst.msk [vmem:[%s1067] sm:$0xff] %vm243, %v1066
        %s1069 = scalar_lea.vmem %s170, 128 [#allocation4]
        %v1070 = vld [vmem:[%s1069] sm:$0xff]
        %v1071 = vld [vmem:[%s1069 + $0x8] sm:$0xff]
        %v1072 = vld [vmem:[%s1069 + $0x10] sm:$0xff]
        %v1073 = vld [vmem:[%s1069 + $0x18] sm:$0xff]
        %v1074 = vpack.c.bf16 %v1066, %v1066
        %v1076 = vsel %vm243, %v1074, 0
        %1078 = vmatprep.subr.bf16.mxu0 0
        %1079 = vmatpush1.bf16.msra.mxu0 0
        %1080 = vmatprep.subr.bf16.mxu0 0
        %1081 = vmatpush1.bf16.msra.mxu0 0
        %1082 = vmatprep.subr.bf16.mxu0 0
        %1083 = vmatpush1.bf16.msra.mxu0 0
        %1084 = vmatprep.subr.bf16.mxu0 0
        %1085 = vmatpush1.bf16.msra.mxu0 0
        %1086 = vmatprep.subr.bf16.mxu0 0
        %1087 = vmatpush1.bf16.msra.mxu0 0
        %1088 = vmatprep.subr.bf16.mxu0 0
        %1089 = vmatpush1.bf16.msra.mxu0 0
        %1090 = vmatprep.subr.bf16.mxu0 0
        %1091 = vmatpush1.bf16.msra.mxu0 %v240
        %1092 = vmatprep.subr.bf16.mxu0 0
        %1093 = vmatpush1.bf16.msra.mxu0 %v239
        %1094 = vmatprep.subr.bf16.mxu0 0
        %1095 = vmatpush2.bf16.msra.mxu0 0
        %1096 = vmatprep.subr.bf16.mxu0 0
        %1097 = vmatpush2.bf16.msra.mxu0 0
        %1098 = vmatprep.subr.bf16.mxu0 0
        %1099 = vmatpush2.bf16.msra.mxu0 0
        %1100 = vmatprep.subr.bf16.mxu0 0
        %1101 = vmatpush2.bf16.msra.mxu0 0
        %1102 = vmatprep.subr.bf16.mxu0 0
        %1103 = vmatpush2.bf16.msra.mxu0 0
        %1104 = vmatprep.subr.bf16.mxu0 0
        %1105 = vmatpush2.bf16.msra.mxu0 0
        %1106 = vmatprep.subr.bf16.mxu0 0
        %1107 = vmatpush2.bf16.msra.mxu0 0
        %1108 = vmatprep.subr.bf16.mxu0 0
        %1109 = vmatpush2.bf16.msra.mxu0 0
        %1110 = vmatprep.mubr.bf16.mxu0 0
        %1111 = vmatmul.mubr.bf16.gmra.mxu0 %v1076
        %v1112 = vpop.f32.mrf.mxu0
        %v1113 = vadd.f32 0.0, %v1112
        %v1114 = vpop.f32.mrf.mxu0
        %v1115 = vpop.f32.mrf.mxu0
        %v1116 = vpop.f32.mrf.mxu0
        %1117 = vdwg.mxu0
        %v1118 = vadd.f32 %v1070, %v1113
        %v1119 = vxor.u32 %v1118, 2147483648
        %v1120 = vmul.f32 %v1119, 1.442695
        %v1121 = vpow.pop %v1120
        %v1122 = vadd.f32 %v1121, 1.0
        %v1123 = vrcp.pop %v1122
        %v1124 = vmul.f32 1.0, %v1123
        %1125 = vmatprep.subr.bf16.mxu0 0
        %1126 = vmatpush1.bf16.msra.mxu0 0
        %1127 = vmatprep.subr.bf16.mxu0 0
        %1128 = vmatpush1.bf16.msra.mxu0 0
        %1129 = vmatprep.subr.bf16.mxu0 0
        %1130 = vmatpush1.bf16.msra.mxu0 0
        %1131 = vmatprep.subr.bf16.mxu0 0
        %1132 = vmatpush1.bf16.msra.mxu0 0
        %1133 = vmatprep.subr.bf16.mxu0 0
        %1134 = vmatpush1.bf16.msra.mxu0 0
        %1135 = vmatprep.subr.bf16.mxu0 0
        %1136 = vmatpush1.bf16.msra.mxu0 0
        %1137 = vmatprep.subr.bf16.mxu0 0
        %1138 = vmatpush1.bf16.msra.mxu0 %v303
        %1139 = vmatprep.subr.bf16.mxu0 0
        %1140 = vmatpush1.bf16.msra.mxu0 %v302
        %1141 = vmatprep.subr.bf16.mxu0 0
        %1142 = vmatpush2.bf16.msra.mxu0 0
        %1143 = vmatprep.subr.bf16.mxu0 0
        %1144 = vmatpush2.bf16.msra.mxu0 0
        %1145 = vmatprep.subr.bf16.mxu0 0
        %1146 = vmatpush2.bf16.msra.mxu0 0
        %1147 = vmatprep.subr.bf16.mxu0 0
        %1148 = vmatpush2.bf16.msra.mxu0 0
        %1149 = vmatprep.subr.bf16.mxu0 0
        %1150 = vmatpush2.bf16.msra.mxu0 0
        %1151 = vmatprep.subr.bf16.mxu0 0
        %1152 = vmatpush2.bf16.msra.mxu0 0
        %1153 = vmatprep.subr.bf16.mxu0 0
        %1154 = vmatpush2.bf16.msra.mxu0 0
        %1155 = vmatprep.subr.bf16.mxu0 0
        %1156 = vmatpush2.bf16.msra.mxu0 0
        %1157 = vmatprep.mubr.bf16.mxu0 0
        %1158 = vmatmul.mubr.bf16.gmra.mxu0 %v1076
        %v1159 = vpop.f32.mrf.mxu0
        %v1160 = vadd.f32 0.0, %v1159
        %v1161 = vpop.f32.mrf.mxu0
        %v1162 = vpop.f32.mrf.mxu0
        %v1163 = vpop.f32.mrf.mxu0
        %1164 = vdwg.mxu0
        %v1165 = vadd.f32 %v1071, %v1160
        %v1166 = vxor.u32 %v1165, 2147483648
        %v1167 = vmul.f32 %v1166, 1.442695
        %v1168 = vpow.pop %v1167
        %v1169 = vadd.f32 %v1168, 1.0
        %v1170 = vrcp.pop %v1169
        %v1171 = vmul.f32 1.0, %v1170
        %1172 = vmatprep.subr.bf16.mxu0 0
        %1173 = vmatpush1.bf16.msra.mxu0 0
        %1174 = vmatprep.subr.bf16.mxu0 0
        %1175 = vmatpush1.bf16.msra.mxu0 0
        %1176 = vmatprep.subr.bf16.mxu0 0
        %1177 = vmatpush1.bf16.msra.mxu0 0
        %1178 = vmatprep.subr.bf16.mxu0 0
        %1179 = vmatpush1.bf16.msra.mxu0 0
        %1180 = vmatprep.subr.bf16.mxu0 0
        %1181 = vmatpush1.bf16.msra.mxu0 0
        %1182 = vmatprep.subr.bf16.mxu0 0
        %1183 = vmatpush1.bf16.msra.mxu0 0
        %1184 = vmatprep.subr.bf16.mxu0 0
        %1185 = vmatpush1.bf16.msra.mxu0 %v362
        %1186 = vmatprep.subr.bf16.mxu0 0
        %1187 = vmatpush1.bf16.msra.mxu0 %v361
        %1188 = vmatprep.subr.bf16.mxu0 0
        %1189 = vmatpush2.bf16.msra.mxu0 0
        %1190 = vmatprep.subr.bf16.mxu0 0
        %1191 = vmatpush2.bf16.msra.mxu0 0
        %1192 = vmatprep.subr.bf16.mxu0 0
        %1193 = vmatpush2.bf16.msra.mxu0 0
        %1194 = vmatprep.subr.bf16.mxu0 0
        %1195 = vmatpush2.bf16.msra.mxu0 0
        %1196 = vmatprep.subr.bf16.mxu0 0
        %1197 = vmatpush2.bf16.msra.mxu0 0
        %1198 = vmatprep.subr.bf16.mxu0 0
        %1199 = vmatpush2.bf16.msra.mxu0 0
        %1200 = vmatprep.subr.bf16.mxu0 0
        %1201 = vmatpush2.bf16.msra.mxu0 0
        %1202 = vmatprep.subr.bf16.mxu0 0
        %1203 = vmatpush2.bf16.msra.mxu0 0
        %1204 = vmatprep.mubr.bf16.mxu0 0
        %1205 = vmatmul.mubr.bf16.gmra.mxu0 %v1076
        %v1206 = vpop.f32.mrf.mxu0
        %v1207 = vadd.f32 0.0, %v1206
        %v1208 = vpop.f32.mrf.mxu0
        %v1209 = vpop.f32.mrf.mxu0
        %v1210 = vpop.f32.mrf.mxu0
        %1211 = vdwg.mxu0
        %v1212 = vadd.f32 %v1072, %v1207
        %v1213 = vtanh.pop %v1212
        %1214 = vmatprep.subr.bf16.mxu0 0
        %1215 = vmatpush1.bf16.msra.mxu0 0
        %1216 = vmatprep.subr.bf16.mxu0 0
        %1217 = vmatpush1.bf16.msra.mxu0 0
        %1218 = vmatprep.subr.bf16.mxu0 0
        %1219 = vmatpush1.bf16.msra.mxu0 0
        %1220 = vmatprep.subr.bf16.mxu0 0
        %1221 = vmatpush1.bf16.msra.mxu0 0
        %1222 = vmatprep.subr.bf16.mxu0 0
        %1223 = vmatpush1.bf16.msra.mxu0 0
        %1224 = vmatprep.subr.bf16.mxu0 0
        %1225 = vmatpush1.bf16.msra.mxu0 0
        %1226 = vmatprep.subr.bf16.mxu0 0
        %1227 = vmatpush1.bf16.msra.mxu0 %v416
        %1228 = vmatprep.subr.bf16.mxu0 0
        %1229 = vmatpush1.bf16.msra.mxu0 %v415
        %1230 = vmatprep.subr.bf16.mxu0 0
        %1231 = vmatpush2.bf16.msra.mxu0 0
        %1232 = vmatprep.subr.bf16.mxu0 0
        %1233 = vmatpush2.bf16.msra.mxu0 0
        %1234 = vmatprep.subr.bf16.mxu0 0
        %1235 = vmatpush2.bf16.msra.mxu0 0
        %1236 = vmatprep.subr.bf16.mxu0 0
        %1237 = vmatpush2.bf16.msra.mxu0 0
        %1238 = vmatprep.subr.bf16.mxu0 0
        %1239 = vmatpush2.bf16.msra.mxu0 0
        %1240 = vmatprep.subr.bf16.mxu0 0
        %1241 = vmatpush2.bf16.msra.mxu0 0
        %1242 = vmatprep.subr.bf16.mxu0 0
        %1243 = vmatpush2.bf16.msra.mxu0 0
        %1244 = vmatprep.subr.bf16.mxu0 0
        %1245 = vmatpush2.bf16.msra.mxu0 0
        %1246 = vmatprep.mubr.bf16.mxu0 0
        %1247 = vmatmul.mubr.bf16.gmra.mxu0 %v1076
        %v1248 = vpop.f32.mrf.mxu0
        %v1249 = vadd.f32 0.0, %v1248
        %v1250 = vpop.f32.mrf.mxu0
        %v1251 = vpop.f32.mrf.mxu0
        %v1252 = vpop.f32.mrf.mxu0
        %1253 = vdwg.mxu0
        %v1254 = vadd.f32 %v1073, %v1249
        %v1255 = vxor.u32 %v1254, 2147483648
        %v1256 = vmul.f32 %v1255, 1.442695
        %v1257 = vpow.pop %v1256
        %v1258 = vadd.f32 %v1257, 1.0
        %v1259 = vrcp.pop %v1258
        %v1260 = vmul.f32 1.0, %v1259
        %v1261 = vmul.f32 %v1171, %v1064
        %v1262 = vmul.f32 %v1124, %v1213
        %v1263 = vadd.f32 %v1261, %v1262
        %v1264 = vtanh.pop %v1263
        %v1265 = vmul.f32 %v1260, %v1264
        %s1266 = scalar_lea.vmem %s194, 32 [#allocation9]
        %1267 = vst.msk [vmem:[%s1266] sm:$0xff] %vm243, %v1265
        %s1268 = scalar_lea.vmem %s170, 160 [#allocation4]
        %v1269 = vld [vmem:[%s1268] sm:$0xff]
        %v1270 = vld [vmem:[%s1268 + $0x8] sm:$0xff]
        %v1271 = vld [vmem:[%s1268 + $0x10] sm:$0xff]
        %v1272 = vld [vmem:[%s1268 + $0x18] sm:$0xff]
        %v1273 = vpack.c.bf16 %v1265, %v1265
        %v1275 = vsel %vm243, %v1273, 0
        %1277 = vmatprep.subr.bf16.mxu0 0
        %1278 = vmatpush1.bf16.msra.mxu0 0
        %1279 = vmatprep.subr.bf16.mxu0 0
        %1280 = vmatpush1.bf16.msra.mxu0 0
        %1281 = vmatprep.subr.bf16.mxu0 0
        %1282 = vmatpush1.bf16.msra.mxu0 0
        %1283 = vmatprep.subr.bf16.mxu0 0
        %1284 = vmatpush1.bf16.msra.mxu0 0
        %1285 = vmatprep.subr.bf16.mxu0 0
        %1286 = vmatpush1.bf16.msra.mxu0 0
        %1287 = vmatprep.subr.bf16.mxu0 0
        %1288 = vmatpush1.bf16.msra.mxu0 0
        %1289 = vmatprep.subr.bf16.mxu0 0
        %1290 = vmatpush1.bf16.msra.mxu0 %v240
        %1291 = vmatprep.subr.bf16.mxu0 0
        %1292 = vmatpush1.bf16.msra.mxu0 %v239
        %1293 = vmatprep.subr.bf16.mxu0 0
        %1294 = vmatpush2.bf16.msra.mxu0 0
        %1295 = vmatprep.subr.bf16.mxu0 0
        %1296 = vmatpush2.bf16.msra.mxu0 0
        %1297 = vmatprep.subr.bf16.mxu0 0
        %1298 = vmatpush2.bf16.msra.mxu0 0
        %1299 = vmatprep.subr.bf16.mxu0 0
        %1300 = vmatpush2.bf16.msra.mxu0 0
        %1301 = vmatprep.subr.bf16.mxu0 0
        %1302 = vmatpush2.bf16.msra.mxu0 0
        %1303 = vmatprep.subr.bf16.mxu0 0
        %1304 = vmatpush2.bf16.msra.mxu0 0
        %1305 = vmatprep.subr.bf16.mxu0 0
        %1306 = vmatpush2.bf16.msra.mxu0 0
        %1307 = vmatprep.subr.bf16.mxu0 0
        %1308 = vmatpush2.bf16.msra.mxu0 0
        %1309 = vmatprep.mubr.bf16.mxu0 0
        %1310 = vmatmul.mubr.bf16.gmra.mxu0 %v1275
        %v1311 = vpop.f32.mrf.mxu0
        %v1312 = vadd.f32 0.0, %v1311
        %v1313 = vpop.f32.mrf.mxu0
        %v1314 = vpop.f32.mrf.mxu0
        %v1315 = vpop.f32.mrf.mxu0
        %1316 = vdwg.mxu0
        %v1317 = vadd.f32 %v1269, %v1312
        %v1318 = vxor.u32 %v1317, 2147483648
        %v1319 = vmul.f32 %v1318, 1.442695
        %v1320 = vpow.pop %v1319
        %v1321 = vadd.f32 %v1320, 1.0
        %v1322 = vrcp.pop %v1321
        %v1323 = vmul.f32 1.0, %v1322
        %1324 = vmatprep.subr.bf16.mxu0 0
        %1325 = vmatpush1.bf16.msra.mxu0 0
        %1326 = vmatprep.subr.bf16.mxu0 0
        %1327 = vmatpush1.bf16.msra.mxu0 0
        %1328 = vmatprep.subr.bf16.mxu0 0
        %1329 = vmatpush1.bf16.msra.mxu0 0
        %1330 = vmatprep.subr.bf16.mxu0 0
        %1331 = vmatpush1.bf16.msra.mxu0 0
        %1332 = vmatprep.subr.bf16.mxu0 0
        %1333 = vmatpush1.bf16.msra.mxu0 0
        %1334 = vmatprep.subr.bf16.mxu0 0
        %1335 = vmatpush1.bf16.msra.mxu0 0
        %1336 = vmatprep.subr.bf16.mxu0 0
        %1337 = vmatpush1.bf16.msra.mxu0 %v303
        %1338 = vmatprep.subr.bf16.mxu0 0
        %1339 = vmatpush1.bf16.msra.mxu0 %v302
        %1340 = vmatprep.subr.bf16.mxu0 0
        %1341 = vmatpush2.bf16.msra.mxu0 0
        %1342 = vmatprep.subr.bf16.mxu0 0
        %1343 = vmatpush2.bf16.msra.mxu0 0
        %1344 = vmatprep.subr.bf16.mxu0 0
        %1345 = vmatpush2.bf16.msra.mxu0 0
        %1346 = vmatprep.subr.bf16.mxu0 0
        %1347 = vmatpush2.bf16.msra.mxu0 0
        %1348 = vmatprep.subr.bf16.mxu0 0
        %1349 = vmatpush2.bf16.msra.mxu0 0
        %1350 = vmatprep.subr.bf16.mxu0 0
        %1351 = vmatpush2.bf16.msra.mxu0 0
        %1352 = vmatprep.subr.bf16.mxu0 0
        %1353 = vmatpush2.bf16.msra.mxu0 0
        %1354 = vmatprep.subr.bf16.mxu0 0
        %1355 = vmatpush2.bf16.msra.mxu0 0
        %1356 = vmatprep.mubr.bf16.mxu0 0
        %1357 = vmatmul.mubr.bf16.gmra.mxu0 %v1275
        %v1358 = vpop.f32.mrf.mxu0
        %v1359 = vadd.f32 0.0, %v1358
        %v1360 = vpop.f32.mrf.mxu0
        %v1361 = vpop.f32.mrf.mxu0
        %v1362 = vpop.f32.mrf.mxu0
        %1363 = vdwg.mxu0
        %v1364 = vadd.f32 %v1270, %v1359
        %v1365 = vxor.u32 %v1364, 2147483648
        %v1366 = vmul.f32 %v1365, 1.442695
        %v1367 = vpow.pop %v1366
        %v1368 = vadd.f32 %v1367, 1.0
        %v1369 = vrcp.pop %v1368
        %v1370 = vmul.f32 1.0, %v1369
        %1371 = vmatprep.subr.bf16.mxu0 0
        %1372 = vmatpush1.bf16.msra.mxu0 0
        %1373 = vmatprep.subr.bf16.mxu0 0
        %1374 = vmatpush1.bf16.msra.mxu0 0
        %1375 = vmatprep.subr.bf16.mxu0 0
        %1376 = vmatpush1.bf16.msra.mxu0 0
        %1377 = vmatprep.subr.bf16.mxu0 0
        %1378 = vmatpush1.bf16.msra.mxu0 0
        %1379 = vmatprep.subr.bf16.mxu0 0
        %1380 = vmatpush1.bf16.msra.mxu0 0
        %1381 = vmatprep.subr.bf16.mxu0 0
        %1382 = vmatpush1.bf16.msra.mxu0 0
        %1383 = vmatprep.subr.bf16.mxu0 0
        %1384 = vmatpush1.bf16.msra.mxu0 %v362
        %1385 = vmatprep.subr.bf16.mxu0 0
        %1386 = vmatpush1.bf16.msra.mxu0 %v361
        %1387 = vmatprep.subr.bf16.mxu0 0
        %1388 = vmatpush2.bf16.msra.mxu0 0
        %1389 = vmatprep.subr.bf16.mxu0 0
        %1390 = vmatpush2.bf16.msra.mxu0 0
        %1391 = vmatprep.subr.bf16.mxu0 0
        %1392 = vmatpush2.bf16.msra.mxu0 0
        %1393 = vmatprep.subr.bf16.mxu0 0
        %1394 = vmatpush2.bf16.msra.mxu0 0
        %1395 = vmatprep.subr.bf16.mxu0 0
        %1396 = vmatpush2.bf16.msra.mxu0 0
        %1397 = vmatprep.subr.bf16.mxu0 0
        %1398 = vmatpush2.bf16.msra.mxu0 0
        %1399 = vmatprep.subr.bf16.mxu0 0
        %1400 = vmatpush2.bf16.msra.mxu0 0
        %1401 = vmatprep.subr.bf16.mxu0 0
        %1402 = vmatpush2.bf16.msra.mxu0 0
        %1403 = vmatprep.mubr.bf16.mxu0 0
        %1404 = vmatmul.mubr.bf16.gmra.mxu0 %v1275
        %v1405 = vpop.f32.mrf.mxu0
        %v1406 = vadd.f32 0.0, %v1405
        %v1407 = vpop.f32.mrf.mxu0
        %v1408 = vpop.f32.mrf.mxu0
        %v1409 = vpop.f32.mrf.mxu0
        %1410 = vdwg.mxu0
        %v1411 = vadd.f32 %v1271, %v1406
        %v1412 = vtanh.pop %v1411
        %1413 = vmatprep.subr.bf16.mxu0 0
        %1414 = vmatpush1.bf16.msra.mxu0 0
        %1415 = vmatprep.subr.bf16.mxu0 0
        %1416 = vmatpush1.bf16.msra.mxu0 0
        %1417 = vmatprep.subr.bf16.mxu0 0
        %1418 = vmatpush1.bf16.msra.mxu0 0
        %1419 = vmatprep.subr.bf16.mxu0 0
        %1420 = vmatpush1.bf16.msra.mxu0 0
        %1421 = vmatprep.subr.bf16.mxu0 0
        %1422 = vmatpush1.bf16.msra.mxu0 0
        %1423 = vmatprep.subr.bf16.mxu0 0
        %1424 = vmatpush1.bf16.msra.mxu0 0
        %1425 = vmatprep.subr.bf16.mxu0 0
        %1426 = vmatpush1.bf16.msra.mxu0 %v416
        %1427 = vmatprep.subr.bf16.mxu0 0
        %1428 = vmatpush1.bf16.msra.mxu0 %v415
        %1429 = vmatprep.subr.bf16.mxu0 0
        %1430 = vmatpush2.bf16.msra.mxu0 0
        %1431 = vmatprep.subr.bf16.mxu0 0
        %1432 = vmatpush2.bf16.msra.mxu0 0
        %1433 = vmatprep.subr.bf16.mxu0 0
        %1434 = vmatpush2.bf16.msra.mxu0 0
        %1435 = vmatprep.subr.bf16.mxu0 0
        %1436 = vmatpush2.bf16.msra.mxu0 0
        %1437 = vmatprep.subr.bf16.mxu0 0
        %1438 = vmatpush2.bf16.msra.mxu0 0
        %1439 = vmatprep.subr.bf16.mxu0 0
        %1440 = vmatpush2.bf16.msra.mxu0 0
        %1441 = vmatprep.subr.bf16.mxu0 0
        %1442 = vmatpush2.bf16.msra.mxu0 0
        %1443 = vmatprep.subr.bf16.mxu0 0
        %1444 = vmatpush2.bf16.msra.mxu0 0
        %1445 = vmatprep.mubr.bf16.mxu0 0
        %1446 = vmatmul.mubr.bf16.gmra.mxu0 %v1275
        %v1447 = vpop.f32.mrf.mxu0
        %v1448 = vadd.f32 0.0, %v1447
        %v1449 = vpop.f32.mrf.mxu0
        %v1450 = vpop.f32.mrf.mxu0
        %v1451 = vpop.f32.mrf.mxu0
        %1452 = vdwg.mxu0
        %v1453 = vadd.f32 %v1272, %v1448
        %v1454 = vxor.u32 %v1453, 2147483648
        %v1455 = vmul.f32 %v1454, 1.442695
        %v1456 = vpow.pop %v1455
        %v1457 = vadd.f32 %v1456, 1.0
        %v1458 = vrcp.pop %v1457
        %v1459 = vmul.f32 1.0, %v1458
        %v1460 = vmul.f32 %v1370, %v1263
        %v1461 = vmul.f32 %v1323, %v1412
        %v1462 = vadd.f32 %v1460, %v1461
        %v1463 = vtanh.pop %v1462
        %v1464 = vmul.f32 %v1459, %v1463
        %s1465 = scalar_lea.vmem %s194, 40 [#allocation9]
        %1466 = vst.msk [vmem:[%s1465] sm:$0xff] %vm243, %v1464
        %s1467 = scalar_lea.vmem %s170, 192 [#allocation4]
        %v1468 = vld [vmem:[%s1467] sm:$0xff]
        %v1469 = vld [vmem:[%s1467 + $0x8] sm:$0xff]
        %v1470 = vld [vmem:[%s1467 + $0x10] sm:$0xff]
        %v1471 = vld [vmem:[%s1467 + $0x18] sm:$0xff]
        %v1472 = vpack.c.bf16 %v1464, %v1464
        %v1474 = vsel %vm243, %v1472, 0
        %1476 = vmatprep.subr.bf16.mxu0 0
        %1477 = vmatpush1.bf16.msra.mxu0 0
        %1478 = vmatprep.subr.bf16.mxu0 0
        %1479 = vmatpush1.bf16.msra.mxu0 0
        %1480 = vmatprep.subr.bf16.mxu0 0
        %1481 = vmatpush1.bf16.msra.mxu0 0
        %1482 = vmatprep.subr.bf16.mxu0 0
        %1483 = vmatpush1.bf16.msra.mxu0 0
        %1484 = vmatprep.subr.bf16.mxu0 0
        %1485 = vmatpush1.bf16.msra.mxu0 0
        %1486 = vmatprep.subr.bf16.mxu0 0
        %1487 = vmatpush1.bf16.msra.mxu0 0
        %1488 = vmatprep.subr.bf16.mxu0 0
        %1489 = vmatpush1.bf16.msra.mxu0 %v240
        %1490 = vmatprep.subr.bf16.mxu0 0
        %1491 = vmatpush1.bf16.msra.mxu0 %v239
        %1492 = vmatprep.subr.bf16.mxu0 0
        %1493 = vmatpush2.bf16.msra.mxu0 0
        %1494 = vmatprep.subr.bf16.mxu0 0
        %1495 = vmatpush2.bf16.msra.mxu0 0
        %1496 = vmatprep.subr.bf16.mxu0 0
        %1497 = vmatpush2.bf16.msra.mxu0 0
        %1498 = vmatprep.subr.bf16.mxu0 0
        %1499 = vmatpush2.bf16.msra.mxu0 0
        %1500 = vmatprep.subr.bf16.mxu0 0
        %1501 = vmatpush2.bf16.msra.mxu0 0
        %1502 = vmatprep.subr.bf16.mxu0 0
        %1503 = vmatpush2.bf16.msra.mxu0 0
        %1504 = vmatprep.subr.bf16.mxu0 0
        %1505 = vmatpush2.bf16.msra.mxu0 0
        %1506 = vmatprep.subr.bf16.mxu0 0
        %1507 = vmatpush2.bf16.msra.mxu0 0
        %1508 = vmatprep.mubr.bf16.mxu0 0
        %1509 = vmatmul.mubr.bf16.gmra.mxu0 %v1474
        %v1510 = vpop.f32.mrf.mxu0
        %v1511 = vadd.f32 0.0, %v1510
        %v1512 = vpop.f32.mrf.mxu0
        %v1513 = vpop.f32.mrf.mxu0
        %v1514 = vpop.f32.mrf.mxu0
        %1515 = vdwg.mxu0
        %v1516 = vadd.f32 %v1468, %v1511
        %v1517 = vxor.u32 %v1516, 2147483648
        %v1518 = vmul.f32 %v1517, 1.442695
        %v1519 = vpow.pop %v1518
        %v1520 = vadd.f32 %v1519, 1.0
        %v1521 = vrcp.pop %v1520
        %v1522 = vmul.f32 1.0, %v1521
        %1523 = vmatprep.subr.bf16.mxu0 0
        %1524 = vmatpush1.bf16.msra.mxu0 0
        %1525 = vmatprep.subr.bf16.mxu0 0
        %1526 = vmatpush1.bf16.msra.mxu0 0
        %1527 = vmatprep.subr.bf16.mxu0 0
        %1528 = vmatpush1.bf16.msra.mxu0 0
        %1529 = vmatprep.subr.bf16.mxu0 0
        %1530 = vmatpush1.bf16.msra.mxu0 0
        %1531 = vmatprep.subr.bf16.mxu0 0
        %1532 = vmatpush1.bf16.msra.mxu0 0
        %1533 = vmatprep.subr.bf16.mxu0 0
        %1534 = vmatpush1.bf16.msra.mxu0 0
        %1535 = vmatprep.subr.bf16.mxu0 0
        %1536 = vmatpush1.bf16.msra.mxu0 %v303
        %1537 = vmatprep.subr.bf16.mxu0 0
        %1538 = vmatpush1.bf16.msra.mxu0 %v302
        %1539 = vmatprep.subr.bf16.mxu0 0
        %1540 = vmatpush2.bf16.msra.mxu0 0
        %1541 = vmatprep.subr.bf16.mxu0 0
        %1542 = vmatpush2.bf16.msra.mxu0 0
        %1543 = vmatprep.subr.bf16.mxu0 0
        %1544 = vmatpush2.bf16.msra.mxu0 0
        %1545 = vmatprep.subr.bf16.mxu0 0
        %1546 = vmatpush2.bf16.msra.mxu0 0
        %1547 = vmatprep.subr.bf16.mxu0 0
        %1548 = vmatpush2.bf16.msra.mxu0 0
        %1549 = vmatprep.subr.bf16.mxu0 0
        %1550 = vmatpush2.bf16.msra.mxu0 0
        %1551 = vmatprep.subr.bf16.mxu0 0
        %1552 = vmatpush2.bf16.msra.mxu0 0
        %1553 = vmatprep.subr.bf16.mxu0 0
        %1554 = vmatpush2.bf16.msra.mxu0 0
        %1555 = vmatprep.mubr.bf16.mxu0 0
        %1556 = vmatmul.mubr.bf16.gmra.mxu0 %v1474
        %v1557 = vpop.f32.mrf.mxu0
        %v1558 = vadd.f32 0.0, %v1557
        %v1559 = vpop.f32.mrf.mxu0
        %v1560 = vpop.f32.mrf.mxu0
        %v1561 = vpop.f32.mrf.mxu0
        %1562 = vdwg.mxu0
        %v1563 = vadd.f32 %v1469, %v1558
        %v1564 = vxor.u32 %v1563, 2147483648
        %v1565 = vmul.f32 %v1564, 1.442695
        %v1566 = vpow.pop %v1565
        %v1567 = vadd.f32 %v1566, 1.0
        %v1568 = vrcp.pop %v1567
        %v1569 = vmul.f32 1.0, %v1568
        %1570 = vmatprep.subr.bf16.mxu0 0
        %1571 = vmatpush1.bf16.msra.mxu0 0
        %1572 = vmatprep.subr.bf16.mxu0 0
        %1573 = vmatpush1.bf16.msra.mxu0 0
        %1574 = vmatprep.subr.bf16.mxu0 0
        %1575 = vmatpush1.bf16.msra.mxu0 0
        %1576 = vmatprep.subr.bf16.mxu0 0
        %1577 = vmatpush1.bf16.msra.mxu0 0
        %1578 = vmatprep.subr.bf16.mxu0 0
        %1579 = vmatpush1.bf16.msra.mxu0 0
        %1580 = vmatprep.subr.bf16.mxu0 0
        %1581 = vmatpush1.bf16.msra.mxu0 0
        %1582 = vmatprep.subr.bf16.mxu0 0
        %1583 = vmatpush1.bf16.msra.mxu0 %v362
        %1584 = vmatprep.subr.bf16.mxu0 0
        %1585 = vmatpush1.bf16.msra.mxu0 %v361
        %1586 = vmatprep.subr.bf16.mxu0 0
        %1587 = vmatpush2.bf16.msra.mxu0 0
        %1588 = vmatprep.subr.bf16.mxu0 0
        %1589 = vmatpush2.bf16.msra.mxu0 0
        %1590 = vmatprep.subr.bf16.mxu0 0
        %1591 = vmatpush2.bf16.msra.mxu0 0
        %1592 = vmatprep.subr.bf16.mxu0 0
        %1593 = vmatpush2.bf16.msra.mxu0 0
        %1594 = vmatprep.subr.bf16.mxu0 0
        %1595 = vmatpush2.bf16.msra.mxu0 0
        %1596 = vmatprep.subr.bf16.mxu0 0
        %1597 = vmatpush2.bf16.msra.mxu0 0
        %1598 = vmatprep.subr.bf16.mxu0 0
        %1599 = vmatpush2.bf16.msra.mxu0 0
        %1600 = vmatprep.subr.bf16.mxu0 0
        %1601 = vmatpush2.bf16.msra.mxu0 0
        %1602 = vmatprep.mubr.bf16.mxu0 0
        %1603 = vmatmul.mubr.bf16.gmra.mxu0 %v1474
        %v1604 = vpop.f32.mrf.mxu0
        %v1605 = vadd.f32 0.0, %v1604
        %v1606 = vpop.f32.mrf.mxu0
        %v1607 = vpop.f32.mrf.mxu0
        %v1608 = vpop.f32.mrf.mxu0
        %1609 = vdwg.mxu0
        %v1610 = vadd.f32 %v1470, %v1605
        %v1611 = vtanh.pop %v1610
        %1612 = vmatprep.subr.bf16.mxu0 0
        %1613 = vmatpush1.bf16.msra.mxu0 0
        %1614 = vmatprep.subr.bf16.mxu0 0
        %1615 = vmatpush1.bf16.msra.mxu0 0
        %1616 = vmatprep.subr.bf16.mxu0 0
        %1617 = vmatpush1.bf16.msra.mxu0 0
        %1618 = vmatprep.subr.bf16.mxu0 0
        %1619 = vmatpush1.bf16.msra.mxu0 0
        %1620 = vmatprep.subr.bf16.mxu0 0
        %1621 = vmatpush1.bf16.msra.mxu0 0
        %1622 = vmatprep.subr.bf16.mxu0 0
        %1623 = vmatpush1.bf16.msra.mxu0 0
        %1624 = vmatprep.subr.bf16.mxu0 0
        %1625 = vmatpush1.bf16.msra.mxu0 %v416
        %1626 = vmatprep.subr.bf16.mxu0 0
        %1627 = vmatpush1.bf16.msra.mxu0 %v415
        %1628 = vmatprep.subr.bf16.mxu0 0
        %1629 = vmatpush2.bf16.msra.mxu0 0
        %1630 = vmatprep.subr.bf16.mxu0 0
        %1631 = vmatpush2.bf16.msra.mxu0 0
        %1632 = vmatprep.subr.bf16.mxu0 0
        %1633 = vmatpush2.bf16.msra.mxu0 0
        %1634 = vmatprep.subr.bf16.mxu0 0
        %1635 = vmatpush2.bf16.msra.mxu0 0
        %1636 = vmatprep.subr.bf16.mxu0 0
        %1637 = vmatpush2.bf16.msra.mxu0 0
        %1638 = vmatprep.subr.bf16.mxu0 0
        %1639 = vmatpush2.bf16.msra.mxu0 0
        %1640 = vmatprep.subr.bf16.mxu0 0
        %1641 = vmatpush2.bf16.msra.mxu0 0
        %1642 = vmatprep.subr.bf16.mxu0 0
        %1643 = vmatpush2.bf16.msra.mxu0 0
        %1644 = vmatprep.mubr.bf16.mxu0 0
        %1645 = vmatmul.mubr.bf16.gmra.mxu0 %v1474
        %v1646 = vpop.f32.mrf.mxu0
        %v1647 = vadd.f32 0.0, %v1646
        %v1648 = vpop.f32.mrf.mxu0
        %v1649 = vpop.f32.mrf.mxu0
        %v1650 = vpop.f32.mrf.mxu0
        %1651 = vdwg.mxu0
        %v1652 = vadd.f32 %v1471, %v1647
        %v1653 = vxor.u32 %v1652, 2147483648
        %v1654 = vmul.f32 %v1653, 1.442695
        %v1655 = vpow.pop %v1654
        %v1656 = vadd.f32 %v1655, 1.0
        %v1657 = vrcp.pop %v1656
        %v1658 = vmul.f32 1.0, %v1657
        %v1659 = vmul.f32 %v1569, %v1462
        %v1660 = vmul.f32 %v1522, %v1611
        %v1661 = vadd.f32 %v1659, %v1660
        %v1662 = vtanh.pop %v1661
        %v1663 = vmul.f32 %v1658, %v1662
        %s1664 = scalar_lea.vmem %s194, 48 [#allocation9]
        %1665 = vst.msk [vmem:[%s1664] sm:$0xff] %vm243, %v1663
        %s1666 = scalar_lea.vmem %s170, 224 [#allocation4]
        %v1667 = vld [vmem:[%s1666] sm:$0xff]
        %v1668 = vld [vmem:[%s1666 + $0x8] sm:$0xff]
        %v1669 = vld [vmem:[%s1666 + $0x10] sm:$0xff]
        %v1670 = vld [vmem:[%s1666 + $0x18] sm:$0xff]
        %v1671 = vpack.c.bf16 %v1663, %v1663
        %v1673 = vsel %vm243, %v1671, 0
        %1675 = vmatprep.subr.bf16.mxu0 0
        %1676 = vmatpush1.bf16.msra.mxu0 0
        %1677 = vmatprep.subr.bf16.mxu0 0
        %1678 = vmatpush1.bf16.msra.mxu0 0
        %1679 = vmatprep.subr.bf16.mxu0 0
        %1680 = vmatpush1.bf16.msra.mxu0 0
        %1681 = vmatprep.subr.bf16.mxu0 0
        %1682 = vmatpush1.bf16.msra.mxu0 0
        %1683 = vmatprep.subr.bf16.mxu0 0
        %1684 = vmatpush1.bf16.msra.mxu0 0
        %1685 = vmatprep.subr.bf16.mxu0 0
        %1686 = vmatpush1.bf16.msra.mxu0 0
        %1687 = vmatprep.subr.bf16.mxu0 0
        %1688 = vmatpush1.bf16.msra.mxu0 %v240
        %1689 = vmatprep.subr.bf16.mxu0 0
        %1690 = vmatpush1.bf16.msra.mxu0 %v239
        %1691 = vmatprep.subr.bf16.mxu0 0
        %1692 = vmatpush2.bf16.msra.mxu0 0
        %1693 = vmatprep.subr.bf16.mxu0 0
        %1694 = vmatpush2.bf16.msra.mxu0 0
        %1695 = vmatprep.subr.bf16.mxu0 0
        %1696 = vmatpush2.bf16.msra.mxu0 0
        %1697 = vmatprep.subr.bf16.mxu0 0
        %1698 = vmatpush2.bf16.msra.mxu0 0
        %1699 = vmatprep.subr.bf16.mxu0 0
        %1700 = vmatpush2.bf16.msra.mxu0 0
        %1701 = vmatprep.subr.bf16.mxu0 0
        %1702 = vmatpush2.bf16.msra.mxu0 0
        %1703 = vmatprep.subr.bf16.mxu0 0
        %1704 = vmatpush2.bf16.msra.mxu0 0
        %1705 = vmatprep.subr.bf16.mxu0 0
        %1706 = vmatpush2.bf16.msra.mxu0 0
        %1707 = vmatprep.mubr.bf16.mxu0 0
        %1708 = vmatmul.mubr.bf16.gmra.mxu0 %v1673
        %v1709 = vpop.f32.mrf.mxu0
        %v1710 = vadd.f32 0.0, %v1709
        %v1711 = vpop.f32.mrf.mxu0
        %v1712 = vpop.f32.mrf.mxu0
        %v1713 = vpop.f32.mrf.mxu0
        %1714 = vdwg.mxu0
        %v1715 = vadd.f32 %v1667, %v1710
        %v1716 = vxor.u32 %v1715, 2147483648
        %v1717 = vmul.f32 %v1716, 1.442695
        %v1718 = vpow.pop %v1717
        %v1719 = vadd.f32 %v1718, 1.0
        %v1720 = vrcp.pop %v1719
        %v1721 = vmul.f32 1.0, %v1720
        %1722 = vmatprep.subr.bf16.mxu0 0
        %1723 = vmatpush1.bf16.msra.mxu0 0
        %1724 = vmatprep.subr.bf16.mxu0 0
        %1725 = vmatpush1.bf16.msra.mxu0 0
        %1726 = vmatprep.subr.bf16.mxu0 0
        %1727 = vmatpush1.bf16.msra.mxu0 0
        %1728 = vmatprep.subr.bf16.mxu0 0
        %1729 = vmatpush1.bf16.msra.mxu0 0
        %1730 = vmatprep.subr.bf16.mxu0 0
        %1731 = vmatpush1.bf16.msra.mxu0 0
        %1732 = vmatprep.subr.bf16.mxu0 0
        %1733 = vmatpush1.bf16.msra.mxu0 0
        %1734 = vmatprep.subr.bf16.mxu0 0
        %1735 = vmatpush1.bf16.msra.mxu0 %v303
        %1736 = vmatprep.subr.bf16.mxu0 0
        %1737 = vmatpush1.bf16.msra.mxu0 %v302
        %1738 = vmatprep.subr.bf16.mxu0 0
        %1739 = vmatpush2.bf16.msra.mxu0 0
        %1740 = vmatprep.subr.bf16.mxu0 0
        %1741 = vmatpush2.bf16.msra.mxu0 0
        %1742 = vmatprep.subr.bf16.mxu0 0
        %1743 = vmatpush2.bf16.msra.mxu0 0
        %1744 = vmatprep.subr.bf16.mxu0 0
        %1745 = vmatpush2.bf16.msra.mxu0 0
        %1746 = vmatprep.subr.bf16.mxu0 0
        %1747 = vmatpush2.bf16.msra.mxu0 0
        %1748 = vmatprep.subr.bf16.mxu0 0
        %1749 = vmatpush2.bf16.msra.mxu0 0
        %1750 = vmatprep.subr.bf16.mxu0 0
        %1751 = vmatpush2.bf16.msra.mxu0 0
        %1752 = vmatprep.subr.bf16.mxu0 0
        %1753 = vmatpush2.bf16.msra.mxu0 0
        %1754 = vmatprep.mubr.bf16.mxu0 0
        %1755 = vmatmul.mubr.bf16.gmra.mxu0 %v1673
        %v1756 = vpop.f32.mrf.mxu0
        %v1757 = vadd.f32 0.0, %v1756
        %v1758 = vpop.f32.mrf.mxu0
        %v1759 = vpop.f32.mrf.mxu0
        %v1760 = vpop.f32.mrf.mxu0
        %1761 = vdwg.mxu0
        %v1762 = vadd.f32 %v1668, %v1757
        %v1763 = vxor.u32 %v1762, 2147483648
        %v1764 = vmul.f32 %v1763, 1.442695
        %v1765 = vpow.pop %v1764
        %v1766 = vadd.f32 %v1765, 1.0
        %v1767 = vrcp.pop %v1766
        %v1768 = vmul.f32 1.0, %v1767
        %1769 = vmatprep.subr.bf16.mxu0 0
        %1770 = vmatpush1.bf16.msra.mxu0 0
        %1771 = vmatprep.subr.bf16.mxu0 0
        %1772 = vmatpush1.bf16.msra.mxu0 0
        %1773 = vmatprep.subr.bf16.mxu0 0
        %1774 = vmatpush1.bf16.msra.mxu0 0
        %1775 = vmatprep.subr.bf16.mxu0 0
        %1776 = vmatpush1.bf16.msra.mxu0 0
        %1777 = vmatprep.subr.bf16.mxu0 0
        %1778 = vmatpush1.bf16.msra.mxu0 0
        %1779 = vmatprep.subr.bf16.mxu0 0
        %1780 = vmatpush1.bf16.msra.mxu0 0
        %1781 = vmatprep.subr.bf16.mxu0 0
        %1782 = vmatpush1.bf16.msra.mxu0 %v362
        %1783 = vmatprep.subr.bf16.mxu0 0
        %1784 = vmatpush1.bf16.msra.mxu0 %v361
        %1785 = vmatprep.subr.bf16.mxu0 0
        %1786 = vmatpush2.bf16.msra.mxu0 0
        %1787 = vmatprep.subr.bf16.mxu0 0
        %1788 = vmatpush2.bf16.msra.mxu0 0
        %1789 = vmatprep.subr.bf16.mxu0 0
        %1790 = vmatpush2.bf16.msra.mxu0 0
        %1791 = vmatprep.subr.bf16.mxu0 0
        %1792 = vmatpush2.bf16.msra.mxu0 0
        %1793 = vmatprep.subr.bf16.mxu0 0
        %1794 = vmatpush2.bf16.msra.mxu0 0
        %1795 = vmatprep.subr.bf16.mxu0 0
        %1796 = vmatpush2.bf16.msra.mxu0 0
        %1797 = vmatprep.subr.bf16.mxu0 0
        %1798 = vmatpush2.bf16.msra.mxu0 0
        %1799 = vmatprep.subr.bf16.mxu0 0
        %1800 = vmatpush2.bf16.msra.mxu0 0
        %1801 = vmatprep.mubr.bf16.mxu0 0
        %1802 = vmatmul.mubr.bf16.gmra.mxu0 %v1673
        %v1803 = vpop.f32.mrf.mxu0
        %v1804 = vadd.f32 0.0, %v1803
        %v1805 = vpop.f32.mrf.mxu0
        %v1806 = vpop.f32.mrf.mxu0
        %v1807 = vpop.f32.mrf.mxu0
        %1808 = vdwg.mxu0
        %v1809 = vadd.f32 %v1669, %v1804
        %v1810 = vtanh.pop %v1809
        %1811 = vmatprep.subr.bf16.mxu0 0
        %1812 = vmatpush1.bf16.msra.mxu0 0
        %1813 = vmatprep.subr.bf16.mxu0 0
        %1814 = vmatpush1.bf16.msra.mxu0 0
        %1815 = vmatprep.subr.bf16.mxu0 0
        %1816 = vmatpush1.bf16.msra.mxu0 0
        %1817 = vmatprep.subr.bf16.mxu0 0
        %1818 = vmatpush1.bf16.msra.mxu0 0
        %1819 = vmatprep.subr.bf16.mxu0 0
        %1820 = vmatpush1.bf16.msra.mxu0 0
        %1821 = vmatprep.subr.bf16.mxu0 0
        %1822 = vmatpush1.bf16.msra.mxu0 0
        %1823 = vmatprep.subr.bf16.mxu0 0
        %1824 = vmatpush1.bf16.msra.mxu0 %v416
        %1825 = vmatprep.subr.bf16.mxu0 0
        %1826 = vmatpush1.bf16.msra.mxu0 %v415
        %1827 = vmatprep.subr.bf16.mxu0 0
        %1828 = vmatpush2.bf16.msra.mxu0 0
        %1829 = vmatprep.subr.bf16.mxu0 0
        %1830 = vmatpush2.bf16.msra.mxu0 0
        %1831 = vmatprep.subr.bf16.mxu0 0
        %1832 = vmatpush2.bf16.msra.mxu0 0
        %1833 = vmatprep.subr.bf16.mxu0 0
        %1834 = vmatpush2.bf16.msra.mxu0 0
        %1835 = vmatprep.subr.bf16.mxu0 0
        %1836 = vmatpush2.bf16.msra.mxu0 0
        %1837 = vmatprep.subr.bf16.mxu0 0
        %1838 = vmatpush2.bf16.msra.mxu0 0
        %1839 = vmatprep.subr.bf16.mxu0 0
        %1840 = vmatpush2.bf16.msra.mxu0 0
        %1841 = vmatprep.subr.bf16.mxu0 0
        %1842 = vmatpush2.bf16.msra.mxu0 0
        %1843 = vmatprep.mubr.bf16.mxu0 0
        %1844 = vmatmul.mubr.bf16.gmra.mxu0 %v1673
        %v1845 = vpop.f32.mrf.mxu0
        %v1846 = vadd.f32 0.0, %v1845
        %v1847 = vpop.f32.mrf.mxu0
        %v1848 = vpop.f32.mrf.mxu0
        %v1849 = vpop.f32.mrf.mxu0
        %1850 = vdwg.mxu0
        %v1851 = vadd.f32 %v1670, %v1846
        %v1852 = vxor.u32 %v1851, 2147483648
        %v1853 = vmul.f32 %v1852, 1.442695
        %v1854 = vpow.pop %v1853
        %v1855 = vadd.f32 %v1854, 1.0
        %v1856 = vrcp.pop %v1855
        %v1857 = vmul.f32 1.0, %v1856
        %v1858 = vmul.f32 %v1768, %v1661
        %v1859 = vmul.f32 %v1721, %v1810
        %v1860 = vadd.f32 %v1858, %v1859
        %v1861 = vtanh.pop %v1860
        %v1862 = vmul.f32 %v1857, %v1861
        %s1863 = scalar_lea.vmem %s194, 56 [#allocation9]
        %1864 = vst.msk [vmem:[%s1863] sm:$0xff] %vm243, %v1862
        %1865 = vst.msk [vmem:[#allocation2] sm:$0xff] %vm243, %v1862
        %1866 = vst.msk [vmem:[#allocation3] sm:$0xff] %vm243, %v1860
        %s1867 = sand.u32 %s91, 1
        %s1868 = scalar_lea.sflag [#allocation6], %s1867
        %s1869 = sand.u32 %s91, 1
        %s1870 = smul.addr %s1869, 64
        %s1871 = scalar_lea.vmem [#allocation9], %s1870
        // Predicated region
        $region41: #{tpu_custom_call.1} parent=27 // pred_check
          %p1872 = pneg %p101
        $region42: #{tpu_custom_call.1} parent=27 // pred_check_branch
          %1874 = sbr.rel (%p1872) target = $region44
        $region43: #{tpu_custom_call.1} parent=27 // pred_region
          %s1875 = smul.u32 8, %s25
          %s1877 = ssub.s32 1024, 1024
          %1878 = vsyncadd %s1868, %s1877
          %s1879 = sadd.s32 %s24, %s1875
          %s1880 = smul.addr %s1879, 128
          %s1881 = scalar_lea.hbm %s2, %s1880
          %s1882 = sshll.u32 %s1871, 4
          %s1883 = int_to_ptr.vmem [resolvable:$true] %s1882
          %1888 = dma.vmem_to_hbm [thread:$0]  %s1883, 1024, %s1881, %s1868, 128, 128, 8
        $region44: #{tpu_custom_call.1} parent=27 // pred_fallthru
          _
      $region28: #{tpu_custom_call.1} parent=5 // pred_fallthru
        _
      %p1889 = scmp.le.s32.totalorder 2, %s15
      // Predicated region
      $region45: #{tpu_custom_call.1} parent=5 // pred_check
        %p1890 = pneg %p1889
      $region46: #{tpu_custom_call.1} parent=5 // pred_check_branch
        %1892 = sbr.rel (%p1890) target = $region48
      $region47: #{tpu_custom_call.1} parent=5 // pred_region
        %s1893 = ssub.s32 %s15, 2
        // Predicated region
        $region49: #{tpu_custom_call.1} parent=47 // pred_check
          %p1894 = pneg %p107
        $region50: #{tpu_custom_call.1} parent=47 // pred_check_branch
          %1896 = sbr.rel (%p1894) target = $region52
        $region51: #{tpu_custom_call.1} parent=47 // pred_region
          %s1897 = sand.u32 %s92, 1
          %s1898 = scalar_lea.sflag [#allocation6], %s1897
          %s1899 = sand.u32 %s92, 1
          %s1900 = smul.addr %s1899, 64
          %s1901 = scalar_lea.vmem [#allocation9], %s1900
          %1902 = dma.done %s1898, 1024
        $region52: #{tpu_custom_call.1} parent=47 // pred_fallthru
          _
      $region48: #{tpu_custom_call.1} parent=5 // pred_fallthru
        _
    $region6: #{tpu_custom_call.1} parent=1 // loop_footer
      %s19 = sadd.s32 1, %s15
    $region7: #{tpu_custom_call.1} parent=1 // loop_footer_branch
      %14 = sbr.rel target = $region3
    $region8: #{tpu_custom_call.1} parent=1 // loop_exit
      _
    %1903 = vsyncpa [#allocation5], 1
    %s1904 = scalar_lea.sflag [#allocation5], 1
    %1905 = vsyncpa %s1904, 1
    %1906 = vsyncpa [#allocation8], 1
    %1907 = vsyncpa [#allocation6], 1
    %s1908 = scalar_lea.sflag [#allocation6], 1
    %1909 = vsyncpa %s1908, 1

</llo_original>
